<compile_context>
chip_gen: v7x
topology: tpu7x:2x2x1
jax: 0.10.0
libtpu: 0.0.40
codegen_flags: <defaults>
</compile_context>

<pallas_src>
import functools

import jax
import jax.numpy as jnp
import numpy as np
from jax import lax
from jax.experimental import pallas as pl
from jax.experimental.pallas import tpu as pltpu

NEG_SLOPE = 0.01  # nn.LeakyReLU default
BN_EPS = 1e-5     # nn.BatchNorm2d default


def _inconv_kernel(x_ref, w1_ref, w2_ref, s0_ref, t0_ref, t1_ref, t2_ref,
                   o_ref, xp1_ref, xp2_ref, *, width, halo):
    """One batch image per grid step, pixels-on-lanes layout.

    x_ref   : (1, Cin, N)            NCHW-flat input tile (f32), N = H*W
    w1_ref  : (9, Cout, Cin)         conv1 per-tap weights, BN1 scale folded (mxu dtype)
    w2_ref  : (9, Cout, Cout)        conv2 per-tap weights, BN2 scale folded (mxu dtype)
    s0/t0   : (Cin, 1)               folded input-BN scale / shift (f32)
    t1      : (Cout, 1)              folded conv1-bias + BN1 shift (f32)
    t2      : (Cout, 1)              folded conv2-bias + BN2 shift (f32)
    o_ref   : (1, Cout, N)           lane-dense, NCHW-flat output tile
    xp1_ref : (Cin, N + 2*halo)      zero-haloed flat BN'd input      (scratch, mxu dtype)
    xp2_ref : (Cout, N + 2*halo)     zero-haloed flat conv1 activation (scratch, mxu dtype)
    """
    _, Cin, N = x_ref.shape
    Cout = w1_ref.shape[1]

    # Column-validity masks: the flat lane shift wraps rows at the image border,
    # so the dx=0 / dx=2 taps must zero the wrapped columns.  Row out-of-bounds
    # always lands in the zero halo, so no row mask is needed.
    col = lax.broadcasted_iota(jnp.int32, (1, N), 1) % width
    mask_l = col > 0            # tap dx=0 reads source column x-1
    mask_r = col < width - 1    # tap dx=2 reads source column x+1

    def fill_padded(xp, interior):
        # Zero halos (aligned full-lane stores), then the lane-dense interior,
        # already cast to the scratch/MXU dtype.
        c, padn = xp.shape
        xp[:, 0:halo] = jnp.zeros((c, halo), xp.dtype)
        xp[:, halo + N:padn] = jnp.zeros((c, padn - halo - N), xp.dtype)
        xp[:, halo:halo + N] = interior.astype(xp.dtype)

    def conv3x3(xp, w_ref):
        # Per-tap accumulation: 9 small MXU matmuls into an f32 accumulator.
        acc = jnp.zeros((Cout, N), jnp.float32)
        for dy in range(3):
            for dx in range(3):
                s = (dy - 1) * width + (dx - 1)
                slab = xp[:, halo + s:halo + s + N]          # (C, N), lane-shifted view
                if dx == 0:
                    slab = jnp.where(mask_l, slab, jnp.zeros_like(slab))
                elif dx == 2:
                    slab = jnp.where(mask_r, slab, jnp.zeros_like(slab))
                acc = acc + jnp.dot(w_ref[dy * 3 + dx], slab,
                                    preferred_element_type=jnp.float32)
        return acc

    # ---- input BatchNorm (folded scale/shift), store padded in mxu dtype ----
    x_bn = x_ref[0] * s0_ref[...] + t0_ref[...]              # (Cin, N), f32 VPU
    fill_padded(xp1_ref, x_bn)

    # ---- conv1 -> bias/BN shift -> LeakyReLU, store padded in mxu dtype ----
    h = conv3x3(xp1_ref, w1_ref) + t1_ref[...]                # (Cout, N), f32
    h = jnp.maximum(h, NEG_SLOPE * h)
    fill_padded(xp2_ref, h)

    # ---- conv2 -> bias/BN shift -> LeakyReLU -> lane-dense NCHW-flat store ----
    y = conv3x3(xp2_ref, w2_ref) + t2_ref[...]                # (Cout, N), f32
    y = jnp.maximum(y, NEG_SLOPE * y)
    o_ref[0] = y.astype(o_ref.dtype)


def _fold_bn(gamma, beta, mean, var, conv_bias=None):
    """Fold (optional conv bias) + inference BatchNorm into scale/shift."""
    scale = gamma / jnp.sqrt(var + BN_EPS)
    shift = beta - mean * scale
    if conv_bias is not None:
        shift = shift + conv_bias * scale
    return scale, shift


def _fold_conv_weight(w, scale, mxu_dtype):
    """(O, I, 3, 3) -> per-tap (9, O, I), tap t = ky*3+kx, post-conv BN scale folded."""
    O, I = w.shape[0], w.shape[1]
    w_taps = jnp.transpose(w, (2, 3, 0, 1)).reshape(9, O, I)
    return (w_taps * scale[None, :, None]).astype(mxu_dtype)


def _vmem_limit_bytes():
    """Generation-aware scoped-VMEM limit (~100 MiB v5e/v6e, ~56 MiB v7x)."""
    try:
        cap = int(pltpu.get_tpu_info().vmem_capacity_bytes)
    except Exception:
        cap = 64 * 1024 * 1024
    return int(min(cap * 7 // 8, 100 * 1024 * 1024))


def inconv_pallas(x_nchw, params, *, mxu_dtype=jnp.bfloat16,
                  out_dtype=jnp.float32):
    """InConv forward. x_nchw: (B, Cin, H, W) -> (B, Cout, H, W).

    Internally everything is NCHW-flat (pixels on the lane axis); the wrapper
    only does free contiguous reshapes, no transposes.  Pass
    mxu_dtype=jnp.float32 for bit-faithful f32 matmuls; the default bf16 is the
    fast path on v6e/v7x.  Set out_dtype=jnp.bfloat16 if the consumer is bf16.
    """
    B, Cin, H, W = x_nchw.shape
    Cout = params['w1'].shape[0]
    N = H * W
    halo = -(-(W + 1) // 128) * 128  # >= W+1, multiple of 128 (aligned halo stores)

    x_flat = x_nchw.reshape(B, Cin, N).astype(jnp.float32)   # NCHW-flat, lane-dense

    s0, t0 = _fold_bn(*params['bn0'])
    s1, t1 = _fold_bn(*params['bn1'], conv_bias=params['b1'])
    s2, t2 = _fold_bn(*params['bn2'], conv_bias=params['b2'])

    w1 = _fold_conv_weight(params['w1'], s1, mxu_dtype)       # (9, Cout, Cin)
    w2 = _fold_conv_weight(params['w2'], s2, mxu_dtype)       # (9, Cout, Cout)
    s0c = s0.reshape(Cin, 1).astype(jnp.float32)
    t0c = t0.reshape(Cin, 1).astype(jnp.float32)
    t1c = t1.reshape(Cout, 1).astype(jnp.float32)
    t2c = t2.reshape(Cout, 1).astype(jnp.float32)

    flops = 2 * B * N * 9 * (Cin * Cout + Cout * Cout)
    bytes_accessed = (4 * B * N * Cin
                      + jnp.dtype(out_dtype).itemsize * B * N * Cout
                      + int(w1.size) * w1.dtype.itemsize
                      + int(w2.size) * w2.dtype.itemsize)

    kernel = functools.partial(_inconv_kernel, width=W, halo=halo)

    out = pl.pallas_call(
        kernel,
        out_shape=jax.ShapeDtypeStruct((B, Cout, N), out_dtype),
        grid_spec=pltpu.PrefetchScalarGridSpec(
            num_scalar_prefetch=0,
            grid=(B,),
            in_specs=[
                pl.BlockSpec((1, Cin, N), lambda b: (b, 0, 0)),
                pl.BlockSpec((9, Cout, Cin), lambda b: (0, 0, 0)),
                pl.BlockSpec((9, Cout, Cout), lambda b: (0, 0, 0)),
                pl.BlockSpec((Cin, 1), lambda b: (0, 0)),
                pl.BlockSpec((Cin, 1), lambda b: (0, 0)),
                pl.BlockSpec((Cout, 1), lambda b: (0, 0)),
                pl.BlockSpec((Cout, 1), lambda b: (0, 0)),
            ],
            out_specs=pl.BlockSpec((1, Cout, N), lambda b: (b, 0, 0)),
            scratch_shapes=[
                pltpu.VMEM((Cin, N + 2 * halo), mxu_dtype),
                pltpu.VMEM((Cout, N + 2 * halo), mxu_dtype),
            ],
        ),
        compiler_params=pltpu.CompilerParams(
            dimension_semantics=("parallel",),
            vmem_limit_bytes=_vmem_limit_bytes()),
        cost_estimate=pl.CostEstimate(flops=flops, transcendentals=0,
                                      bytes_accessed=int(bytes_accessed)),
    )(x_flat, w1, w2, s0c, t0c, t1c, t2c)

    # (B, Cout, H*W) -> (B, Cout, H, W): contiguous reshape, no transpose needed.
    return out.reshape(B, Cout, H, W)


def inconv_reference(x_nchw, params):
    """Pure-JAX NCHW reference mirroring the PyTorch module (eval-mode BN)."""
    def bn(x, g, b, m, v):
        inv = 1.0 / jnp.sqrt(v + BN_EPS)
        return (x - m[None, :, None, None]) * (g * inv)[None, :, None, None] \
            + b[None, :, None, None]

    def conv(x, w, b):
        y = lax.conv_general_dilated(
            x, w, window_strides=(1, 1), padding=((1, 1), (1, 1)),
            dimension_numbers=('NCHW', 'OIHW', 'NCHW'))
        return y + b[None, :, None, None]

    x = bn(x_nchw, *params['bn0'])
    y = bn(conv(x, params['w1'], params['b1']), *params['bn1'])
    y = jnp.where(y >= 0, y, NEG_SLOPE * y)
    z = bn(conv(y, params['w2'], params['b2']), *params['bn2'])
    z = jnp.where(z >= 0, z, NEG_SLOPE * z)
    return z


def make_params(key, in_ch, out_ch):
    ks = jax.random.split(key, 16)

    def bn_params(k, c):
        k1, k2, k3, k4 = jax.random.split(k, 4)
        gamma = 1.0 + 0.1 * jax.random.normal(k1, (c,), jnp.float32)
        beta = 0.1 * jax.random.normal(k2, (c,), jnp.float32)
        mean = 0.1 * jax.random.normal(k3, (c,), jnp.float32)
        var = jnp.abs(jax.random.normal(k4, (c,), jnp.float32)) + 0.5
        return (gamma, beta, mean, var)

    return {
        'bn0': bn_params(ks[0], in_ch),
        'w1': 0.1 * jax.random.normal(ks[1], (out_ch, in_ch, 3, 3), jnp.float32),
        'b1': 0.1 * jax.random.normal(ks[2], (out_ch,), jnp.float32),
        'bn1': bn_params(ks[3], out_ch),
        'w2': 0.1 * jax.random.normal(ks[4], (out_ch, out_ch, 3, 3), jnp.float32),
        'b2': 0.1 * jax.random.normal(ks[5], (out_ch,), jnp.float32),
        'bn2': bn_params(ks[6], out_ch),
    }


if __name__ == "__main__":
    key = jax.random.PRNGKey(0)
    kx, kp = jax.random.split(key)

    B, Cin, Cout, H, W = 2, 4, 8, 16, 16
    x = jax.random.normal(kx, (B, Cin, H, W), jnp.float32)
    params = make_params(kp, Cin, Cout)

    ref = jax.block_until_ready(inconv_reference(x, params))

    # Exactness check: f32 MXU operands / f32 scratch.
    out_f32 = jax.block_until_ready(
        inconv_pallas(x, params, mxu_dtype=jnp.float32))
    np.testing.assert_allclose(np.asarray(out_f32), np.asarray(ref),
                               rtol=1e-4, atol=1e-4)

    # Default fast path: bf16 MXU operands / bf16 scratch, f32 accumulation.
    out_bf16 = jax.block_until_ready(inconv_pallas(x, params))
    np.testing.assert_allclose(np.asarray(out_bf16), np.asarray(ref),
                               rtol=1e-1, atol=1e-1)

    print("KERNEL_OK")
</pallas_src>

<mosaic_0001>
module attributes {stable_mosaic.version = 11 : i64} {
  func.func @_inconv_kernel(%arg0: i32, %arg1: memref<1x4x256xf32, #tpu.memory_space<vmem>>, %arg2: memref<9x8x4xf32, #tpu.memory_space<vmem>>, %arg3: memref<9x8x8xf32, #tpu.memory_space<vmem>>, %arg4: memref<4x1xf32, #tpu.memory_space<vmem>>, %arg5: memref<4x1xf32, #tpu.memory_space<vmem>>, %arg6: memref<8x1xf32, #tpu.memory_space<vmem>>, %arg7: memref<8x1xf32, #tpu.memory_space<vmem>>, %arg8: memref<1x8x256xf32, #tpu.memory_space<vmem>>, %arg9: memref<4x512xf32, #tpu.memory_space<vmem>>, %arg10: memref<8x512xf32, #tpu.memory_space<vmem>>) attributes {dimension_semantics = [#tpu.dimension_semantics<parallel>], iteration_bounds = array<i64: 2>, scalar_prefetch = 0 : i64, scratch_operands = 2 : i64, tpu.core_type = #tpu.core_type<tc>, window_params = [{transform_indices = @transform_0, window_bounds = array<i64: 1, 4, 256>}, {pipeline_mode = #tpu.pipeline_mode<synchronous>, transform_indices = @transform_1, window_bounds = array<i64: 9, 8, 4>}, {pipeline_mode = #tpu.pipeline_mode<synchronous>, transform_indices = @transform_2, window_bounds = array<i64: 9, 8, 8>}, {pipeline_mode = #tpu.pipeline_mode<synchronous>, transform_indices = @transform_3, window_bounds = array<i64: 4, 1>}, {pipeline_mode = #tpu.pipeline_mode<synchronous>, transform_indices = @transform_4, window_bounds = array<i64: 4, 1>}, {pipeline_mode = #tpu.pipeline_mode<synchronous>, transform_indices = @transform_5, window_bounds = array<i64: 8, 1>}, {pipeline_mode = #tpu.pipeline_mode<synchronous>, transform_indices = @transform_6, window_bounds = array<i64: 8, 1>}, {transform_indices = @transform_7, window_bounds = array<i64: 1, 8, 256>}]} {
    %0 = tpu.iota {dimensions = array<i32: 1>} : vector<1x256xi32>
    %c16_i32 = arith.constant 16 : i32
    %c0_i32 = arith.constant 0 : i32
    %1 = arith.cmpi eq, %c16_i32, %c0_i32 : i32
    %c1_i32 = arith.constant 1 : i32
    %2 = arith.select %1, %c1_i32, %c16_i32 : i32
    %3 = vector.broadcast %2 : i32 to vector<1x256xi32>
    %4 = arith.remsi %0, %3 : vector<1x256xi32>
    %c0_i32_0 = arith.constant 0 : i32
    %5 = vector.broadcast %c0_i32_0 : i32 to vector<1x256xi32>
    %6 = arith.cmpi ne, %4, %5 : vector<1x256xi32>
    %c0_i32_1 = arith.constant 0 : i32
    %7 = vector.broadcast %c0_i32_1 : i32 to vector<1x256xi32>
    %8 = arith.cmpi slt, %4, %7 : vector<1x256xi32>
    %c0_i32_2 = arith.constant 0 : i32
    %9 = arith.cmpi slt, %2, %c0_i32_2 : i32
    %10 = vector.broadcast %9 : i1 to vector<1x256xi1>
    %11 = vector.broadcast %10 : vector<1x256xi1> to vector<1x256xi1>
    %12 = arith.xori %8, %11 : vector<1x256xi1>
    %13 = arith.andi %12, %6 : vector<1x256xi1>
    %14 = vector.broadcast %2 : i32 to vector<1x256xi32>
    %15 = arith.addi %4, %14 : vector<1x256xi32>
    %16 = arith.select %13, %15, %4 : vector<1x256xi1>, vector<1x256xi32>
    %c0_i32_3 = arith.constant 0 : i32
    %17 = vector.broadcast %c0_i32_3 : i32 to vector<1x256xi32>
    %18 = arith.cmpi sgt, %16, %17 : vector<1x256xi32>
    %c15_i32 = arith.constant 15 : i32
    %19 = vector.broadcast %c15_i32 : i32 to vector<1x256xi32>
    %20 = arith.cmpi slt, %16, %19 : vector<1x256xi32>
    %c0 = arith.constant 0 : index
    %c0_4 = arith.constant 0 : index
    %c0_5 = arith.constant 0 : index
    %21 = vector.load %arg1[%c0, %c0_4, %c0_5] : memref<1x4x256xf32, #tpu.memory_space<vmem>>, vector<1x4x256xf32>
    %22 = vector.shape_cast %21 : vector<1x4x256xf32> to vector<4x256xf32>
    %c0_6 = arith.constant 0 : index
    %c0_7 = arith.constant 0 : index
    %23 = vector.load %arg4[%c0_6, %c0_7] : memref<4x1xf32, #tpu.memory_space<vmem>>, vector<4x1xf32>
    %24 = vector.broadcast %23 : vector<4x1xf32> to vector<4x256xf32>
    %25 = arith.mulf %22, %24 : vector<4x256xf32>
    %c0_8 = arith.constant 0 : index
    %c0_9 = arith.constant 0 : index
    %26 = vector.load %arg5[%c0_8, %c0_9] : memref<4x1xf32, #tpu.memory_space<vmem>>, vector<4x1xf32>
    %27 = vector.broadcast %26 : vector<4x1xf32> to vector<4x256xf32>
    %28 = arith.addf %25, %27 : vector<4x256xf32>
    %cst = arith.constant 0.000000e+00 : f32
    %29 = vector.broadcast %cst : f32 to vector<4x128xf32>
    %c0_10 = arith.constant 0 : index
    %c0_11 = arith.constant 0 : index
    %30 = vector.load %arg9[%c0_10, %c0_11] : memref<4x512xf32, #tpu.memory_space<vmem>>, vector<4x128xf32>
    tpu.vector_store %arg9[%c0_10, %c0_11], %29 {strides = array<i32>} : memref<4x512xf32, #tpu.memory_space<vmem>>, vector<4x128xf32>,
    %cst_12 = arith.constant 0.000000e+00 : f32
    %31 = vector.broadcast %cst_12 : f32 to vector<4x128xf32>
    %c0_13 = arith.constant 0 : index
    %c384 = arith.constant 384 : index
    %32 = vector.load %arg9[%c0_13, %c384] : memref<4x512xf32, #tpu.memory_space<vmem>>, vector<4x128xf32>
    tpu.vector_store %arg9[%c0_13, %c384], %31 {strides = array<i32>} : memref<4x512xf32, #tpu.memory_space<vmem>>, vector<4x128xf32>,
    %c0_14 = arith.constant 0 : index
    %c128 = arith.constant 128 : index
    %33 = vector.load %arg9[%c0_14, %c128] : memref<4x512xf32, #tpu.memory_space<vmem>>, vector<4x256xf32>
    tpu.vector_store %arg9[%c0_14, %c128], %28 {strides = array<i32>} : memref<4x512xf32, #tpu.memory_space<vmem>>, vector<4x256xf32>,
    %cst_15 = arith.constant 0.000000e+00 : f32
    %34 = vector.broadcast %cst_15 : f32 to vector<8x256xf32>
    %c0_16 = arith.constant 0 : index
    %c111 = arith.constant 111 : index
    %35 = vector.load %arg9[%c0_16, %c111] : memref<4x512xf32, #tpu.memory_space<vmem>>, vector<4x256xf32>
    %cst_17 = arith.constant 0.000000e+00 : f32
    %36 = vector.broadcast %cst_17 : f32 to vector<4x256xf32>
    %37 = vector.shape_cast %18 : vector<1x256xi1> to vector<1x256xi1>
    %38 = vector.broadcast %37 : vector<1x256xi1> to vector<4x256xi1>
    %39 = arith.select %38, %35, %36 : vector<4x256xi1>, vector<4x256xf32>
    %c0_18 = arith.constant 0 : index
    %c0_19 = arith.constant 0 : index
    %c0_20 = arith.constant 0 : index
    %40 = vector.load %arg2[%c0_18, %c0_19, %c0_20] : memref<9x8x4xf32, #tpu.memory_space<vmem>>, vector<1x8x4xf32>
    %41 = vector.shape_cast %40 : vector<1x8x4xf32> to vector<8x4xf32>
    %cst_21 = arith.constant dense<0.000000e+00> : vector<8x256xf32>
    %42 = tpu.matmul %41, %39, %cst_21 {dimension_numbers = #tpu.dot_dimension_numbers<[1], [0], [0], [1], [0, 0, 1, 1], [], []>} : vector<8x4xf32>, vector<4x256xf32>, vector<8x256xf32> -> vector<8x256xf32>
    %43 = arith.addf %34, %42 : vector<8x256xf32>
    %c0_22 = arith.constant 0 : index
    %c112 = arith.constant 112 : index
    %44 = vector.load %arg9[%c0_22, %c112] : memref<4x512xf32, #tpu.memory_space<vmem>>, vector<4x256xf32>
    %c1 = arith.constant 1 : index
    %c0_23 = arith.constant 0 : index
    %c0_24 = arith.constant 0 : index
    %45 = vector.load %arg2[%c1, %c0_23, %c0_24] : memref<9x8x4xf32, #tpu.memory_space<vmem>>, vector<1x8x4xf32>
    %46 = vector.shape_cast %45 : vector<1x8x4xf32> to vector<8x4xf32>
    %cst_25 = arith.constant dense<0.000000e+00> : vector<8x256xf32>
    %47 = tpu.matmul %46, %44, %cst_25 {dimension_numbers = #tpu.dot_dimension_numbers<[1], [0], [0], [1], [0, 0, 1, 1], [], []>} : vector<8x4xf32>, vector<4x256xf32>, vector<8x256xf32> -> vector<8x256xf32>
    %48 = arith.addf %43, %47 : vector<8x256xf32>
    %c0_26 = arith.constant 0 : index
    %c113 = arith.constant 113 : index
    %49 = vector.load %arg9[%c0_26, %c113] : memref<4x512xf32, #tpu.memory_space<vmem>>, vector<4x256xf32>
    %cst_27 = arith.constant 0.000000e+00 : f32
    %50 = vector.broadcast %cst_27 : f32 to vector<4x256xf32>
    %51 = vector.shape_cast %20 : vector<1x256xi1> to vector<1x256xi1>
    %52 = vector.broadcast %51 : vector<1x256xi1> to vector<4x256xi1>
    %53 = arith.select %52, %49, %50 : vector<4x256xi1>, vector<4x256xf32>
    %c2 = arith.constant 2 : index
    %c0_28 = arith.constant 0 : index
    %c0_29 = arith.constant 0 : index
    %54 = vector.load %arg2[%c2, %c0_28, %c0_29] : memref<9x8x4xf32, #tpu.memory_space<vmem>>, vector<1x8x4xf32>
    %55 = vector.shape_cast %54 : vector<1x8x4xf32> to vector<8x4xf32>
    %cst_30 = arith.constant dense<0.000000e+00> : vector<8x256xf32>
    %56 = tpu.matmul %55, %53, %cst_30 {dimension_numbers = #tpu.dot_dimension_numbers<[1], [0], [0], [1], [0, 0, 1, 1], [], []>} : vector<8x4xf32>, vector<4x256xf32>, vector<8x256xf32> -> vector<8x256xf32>
    %57 = arith.addf %48, %56 : vector<8x256xf32>
    %c0_31 = arith.constant 0 : index
    %c127 = arith.constant 127 : index
    %58 = vector.load %arg9[%c0_31, %c127] : memref<4x512xf32, #tpu.memory_space<vmem>>, vector<4x256xf32>
    %cst_32 = arith.constant 0.000000e+00 : f32
    %59 = vector.broadcast %cst_32 : f32 to vector<4x256xf32>
    %60 = vector.shape_cast %18 : vector<1x256xi1> to vector<1x256xi1>
    %61 = vector.broadcast %60 : vector<1x256xi1> to vector<4x256xi1>
    %62 = arith.select %61, %58, %59 : vector<4x256xi1>, vector<4x256xf32>
    %c3 = arith.constant 3 : index
    %c0_33 = arith.constant 0 : index
    %c0_34 = arith.constant 0 : index
    %63 = vector.load %arg2[%c3, %c0_33, %c0_34] : memref<9x8x4xf32, #tpu.memory_space<vmem>>, vector<1x8x4xf32>
    %64 = vector.shape_cast %63 : vector<1x8x4xf32> to vector<8x4xf32>
    %cst_35 = arith.constant dense<0.000000e+00> : vector<8x256xf32>
    %65 = tpu.matmul %64, %62, %cst_35 {dimension_numbers = #tpu.dot_dimension_numbers<[1], [0], [0], [1], [0, 0, 1, 1], [], []>} : vector<8x4xf32>, vector<4x256xf32>, vector<8x256xf32> -> vector<8x256xf32>
    %66 = arith.addf %57, %65 : vector<8x256xf32>
    %c0_36 = arith.constant 0 : index
    %c128_37 = arith.constant 128 : index
    %67 = vector.load %arg9[%c0_36, %c128_37] : memref<4x512xf32, #tpu.memory_space<vmem>>, vector<4x256xf32>
    %c4 = arith.constant 4 : index
    %c0_38 = arith.constant 0 : index
    %c0_39 = arith.constant 0 : index
    %68 = vector.load %arg2[%c4, %c0_38, %c0_39] : memref<9x8x4xf32, #tpu.memory_space<vmem>>, vector<1x8x4xf32>
    %69 = vector.shape_cast %68 : vector<1x8x4xf32> to vector<8x4xf32>
    %cst_40 = arith.constant dense<0.000000e+00> : vector<8x256xf32>
    %70 = tpu.matmul %69, %67, %cst_40 {dimension_numbers = #tpu.dot_dimension_numbers<[1], [0], [0], [1], [0, 0, 1, 1], [], []>} : vector<8x4xf32>, vector<4x256xf32>, vector<8x256xf32> -> vector<8x256xf32>
    %71 = arith.addf %66, %70 : vector<8x256xf32>
    %c0_41 = arith.constant 0 : index
    %c129 = arith.constant 129 : index
    %72 = vector.load %arg9[%c0_41, %c129] : memref<4x512xf32, #tpu.memory_space<vmem>>, vector<4x256xf32>
    %cst_42 = arith.constant 0.000000e+00 : f32
    %73 = vector.broadcast %cst_42 : f32 to vector<4x256xf32>
    %74 = vector.shape_cast %20 : vector<1x256xi1> to vector<1x256xi1>
    %75 = vector.broadcast %74 : vector<1x256xi1> to vector<4x256xi1>
    %76 = arith.select %75, %72, %73 : vector<4x256xi1>, vector<4x256xf32>
    %c5 = arith.constant 5 : index
    %c0_43 = arith.constant 0 : index
    %c0_44 = arith.constant 0 : index
    %77 = vector.load %arg2[%c5, %c0_43, %c0_44] : memref<9x8x4xf32, #tpu.memory_space<vmem>>, vector<1x8x4xf32>
    %78 = vector.shape_cast %77 : vector<1x8x4xf32> to vector<8x4xf32>
    %cst_45 = arith.constant dense<0.000000e+00> : vector<8x256xf32>
    %79 = tpu.matmul %78, %76, %cst_45 {dimension_numbers = #tpu.dot_dimension_numbers<[1], [0], [0], [1], [0, 0, 1, 1], [], []>} : vector<8x4xf32>, vector<4x256xf32>, vector<8x256xf32> -> vector<8x256xf32>
    %80 = arith.addf %71, %79 : vector<8x256xf32>
    %c0_46 = arith.constant 0 : index
    %c143 = arith.constant 143 : index
    %81 = vector.load %arg9[%c0_46, %c143] : memref<4x512xf32, #tpu.memory_space<vmem>>, vector<4x256xf32>
    %cst_47 = arith.constant 0.000000e+00 : f32
    %82 = vector.broadcast %cst_47 : f32 to vector<4x256xf32>
    %83 = vector.shape_cast %18 : vector<1x256xi1> to vector<1x256xi1>
    %84 = vector.broadcast %83 : vector<1x256xi1> to vector<4x256xi1>
    %85 = arith.select %84, %81, %82 : vector<4x256xi1>, vector<4x256xf32>
    %c6 = arith.constant 6 : index
    %c0_48 = arith.constant 0 : index
    %c0_49 = arith.constant 0 : index
    %86 = vector.load %arg2[%c6, %c0_48, %c0_49] : memref<9x8x4xf32, #tpu.memory_space<vmem>>, vector<1x8x4xf32>
    %87 = vector.shape_cast %86 : vector<1x8x4xf32> to vector<8x4xf32>
    %cst_50 = arith.constant dense<0.000000e+00> : vector<8x256xf32>
    %88 = tpu.matmul %87, %85, %cst_50 {dimension_numbers = #tpu.dot_dimension_numbers<[1], [0], [0], [1], [0, 0, 1, 1], [], []>} : vector<8x4xf32>, vector<4x256xf32>, vector<8x256xf32> -> vector<8x256xf32>
    %89 = arith.addf %80, %88 : vector<8x256xf32>
    %c0_51 = arith.constant 0 : index
    %c144 = arith.constant 144 : index
    %90 = vector.load %arg9[%c0_51, %c144] : memref<4x512xf32, #tpu.memory_space<vmem>>, vector<4x256xf32>
    %c7 = arith.constant 7 : index
    %c0_52 = arith.constant 0 : index
    %c0_53 = arith.constant 0 : index
    %91 = vector.load %arg2[%c7, %c0_52, %c0_53] : memref<9x8x4xf32, #tpu.memory_space<vmem>>, vector<1x8x4xf32>
    %92 = vector.shape_cast %91 : vector<1x8x4xf32> to vector<8x4xf32>
    %cst_54 = arith.constant dense<0.000000e+00> : vector<8x256xf32>
    %93 = tpu.matmul %92, %90, %cst_54 {dimension_numbers = #tpu.dot_dimension_numbers<[1], [0], [0], [1], [0, 0, 1, 1], [], []>} : vector<8x4xf32>, vector<4x256xf32>, vector<8x256xf32> -> vector<8x256xf32>
    %94 = arith.addf %89, %93 : vector<8x256xf32>
    %c0_55 = arith.constant 0 : index
    %c145 = arith.constant 145 : index
    %95 = vector.load %arg9[%c0_55, %c145] : memref<4x512xf32, #tpu.memory_space<vmem>>, vector<4x256xf32>
    %cst_56 = arith.constant 0.000000e+00 : f32
    %96 = vector.broadcast %cst_56 : f32 to vector<4x256xf32>
    %97 = vector.shape_cast %20 : vector<1x256xi1> to vector<1x256xi1>
    %98 = vector.broadcast %97 : vector<1x256xi1> to vector<4x256xi1>
    %99 = arith.select %98, %95, %96 : vector<4x256xi1>, vector<4x256xf32>
    %c8 = arith.constant 8 : index
    %c0_57 = arith.constant 0 : index
    %c0_58 = arith.constant 0 : index
    %100 = vector.load %arg2[%c8, %c0_57, %c0_58] : memref<9x8x4xf32, #tpu.memory_space<vmem>>, vector<1x8x4xf32>
    %101 = vector.shape_cast %100 : vector<1x8x4xf32> to vector<8x4xf32>
    %cst_59 = arith.constant dense<0.000000e+00> : vector<8x256xf32>
    %102 = tpu.matmul %101, %99, %cst_59 {dimension_numbers = #tpu.dot_dimension_numbers<[1], [0], [0], [1], [0, 0, 1, 1], [], []>} : vector<8x4xf32>, vector<4x256xf32>, vector<8x256xf32> -> vector<8x256xf32>
    %103 = arith.addf %94, %102 : vector<8x256xf32>
    %c0_60 = arith.constant 0 : index
    %c0_61 = arith.constant 0 : index
    %104 = vector.load %arg6[%c0_60, %c0_61] : memref<8x1xf32, #tpu.memory_space<vmem>>, vector<8x1xf32>
    %105 = vector.broadcast %104 : vector<8x1xf32> to vector<8x256xf32>
    %106 = arith.addf %103, %105 : vector<8x256xf32>
    %cst_62 = arith.constant 0.00999999977 : f32
    %107 = vector.broadcast %cst_62 : f32 to vector<8x256xf32>
    %108 = arith.mulf %107, %106 : vector<8x256xf32>
    %109 = arith.maximumf %106, %108 : vector<8x256xf32>
    %cst_63 = arith.constant 0.000000e+00 : f32
    %110 = vector.broadcast %cst_63 : f32 to vector<8x128xf32>
    %c0_64 = arith.constant 0 : index
    %c0_65 = arith.constant 0 : index
    %111 = vector.load %arg10[%c0_64, %c0_65] : memref<8x512xf32, #tpu.memory_space<vmem>>, vector<8x128xf32>
    tpu.vector_store %arg10[%c0_64, %c0_65], %110 {strides = array<i32>} : memref<8x512xf32, #tpu.memory_space<vmem>>, vector<8x128xf32>,
    %cst_66 = arith.constant 0.000000e+00 : f32
    %112 = vector.broadcast %cst_66 : f32 to vector<8x128xf32>
    %c0_67 = arith.constant 0 : index
    %c384_68 = arith.constant 384 : index
    %113 = vector.load %arg10[%c0_67, %c384_68] : memref<8x512xf32, #tpu.memory_space<vmem>>, vector<8x128xf32>
    tpu.vector_store %arg10[%c0_67, %c384_68], %112 {strides = array<i32>} : memref<8x512xf32, #tpu.memory_space<vmem>>, vector<8x128xf32>,
    %c0_69 = arith.constant 0 : index
    %c128_70 = arith.constant 128 : index
    %114 = vector.load %arg10[%c0_69, %c128_70] : memref<8x512xf32, #tpu.memory_space<vmem>>, vector<8x256xf32>
    tpu.vector_store %arg10[%c0_69, %c128_70], %109 {strides = array<i32>} : memref<8x512xf32, #tpu.memory_space<vmem>>, vector<8x256xf32>,
    %cst_71 = arith.constant 0.000000e+00 : f32
    %115 = vector.broadcast %cst_71 : f32 to vector<8x256xf32>
    %c0_72 = arith.constant 0 : index
    %c111_73 = arith.constant 111 : index
    %116 = vector.load %arg10[%c0_72, %c111_73] : memref<8x512xf32, #tpu.memory_space<vmem>>, vector<8x256xf32>
    %cst_74 = arith.constant 0.000000e+00 : f32
    %117 = vector.broadcast %cst_74 : f32 to vector<8x256xf32>
    %118 = vector.shape_cast %18 : vector<1x256xi1> to vector<1x256xi1>
    %119 = vector.broadcast %118 : vector<1x256xi1> to vector<8x256xi1>
    %120 = arith.select %119, %116, %117 : vector<8x256xi1>, vector<8x256xf32>
    %c0_75 = arith.constant 0 : index
    %c0_76 = arith.constant 0 : index
    %c0_77 = arith.constant 0 : index
    %121 = vector.load %arg3[%c0_75, %c0_76, %c0_77] : memref<9x8x8xf32, #tpu.memory_space<vmem>>, vector<1x8x8xf32>
    %122 = vector.shape_cast %121 : vector<1x8x8xf32> to vector<8x8xf32>
    %cst_78 = arith.constant dense<0.000000e+00> : vector<8x256xf32>
    %123 = tpu.matmul %122, %120, %cst_78 {dimension_numbers = #tpu.dot_dimension_numbers<[1], [0], [0], [1], [0, 0, 1, 1], [], []>} : vector<8x8xf32>, vector<8x256xf32>, vector<8x256xf32> -> vector<8x256xf32>
    %124 = arith.addf %115, %123 : vector<8x256xf32>
    %c0_79 = arith.constant 0 : index
    %c112_80 = arith.constant 112 : index
    %125 = vector.load %arg10[%c0_79, %c112_80] : memref<8x512xf32, #tpu.memory_space<vmem>>, vector<8x256xf32>
    %c1_81 = arith.constant 1 : index
    %c0_82 = arith.constant 0 : index
    %c0_83 = arith.constant 0 : index
    %126 = vector.load %arg3[%c1_81, %c0_82, %c0_83] : memref<9x8x8xf32, #tpu.memory_space<vmem>>, vector<1x8x8xf32>
    %127 = vector.shape_cast %126 : vector<1x8x8xf32> to vector<8x8xf32>
    %cst_84 = arith.constant dense<0.000000e+00> : vector<8x256xf32>
    %128 = tpu.matmul %127, %125, %cst_84 {dimension_numbers = #tpu.dot_dimension_numbers<[1], [0], [0], [1], [0, 0, 1, 1], [], []>} : vector<8x8xf32>, vector<8x256xf32>, vector<8x256xf32> -> vector<8x256xf32>
    %129 = arith.addf %124, %128 : vector<8x256xf32>
    %c0_85 = arith.constant 0 : index
    %c113_86 = arith.constant 113 : index
    %130 = vector.load %arg10[%c0_85, %c113_86] : memref<8x512xf32, #tpu.memory_space<vmem>>, vector<8x256xf32>
    %cst_87 = arith.constant 0.000000e+00 : f32
    %131 = vector.broadcast %cst_87 : f32 to vector<8x256xf32>
    %132 = vector.shape_cast %20 : vector<1x256xi1> to vector<1x256xi1>
    %133 = vector.broadcast %132 : vector<1x256xi1> to vector<8x256xi1>
    %134 = arith.select %133, %130, %131 : vector<8x256xi1>, vector<8x256xf32>
    %c2_88 = arith.constant 2 : index
    %c0_89 = arith.constant 0 : index
    %c0_90 = arith.constant 0 : index
    %135 = vector.load %arg3[%c2_88, %c0_89, %c0_90] : memref<9x8x8xf32, #tpu.memory_space<vmem>>, vector<1x8x8xf32>
    %136 = vector.shape_cast %135 : vector<1x8x8xf32> to vector<8x8xf32>
    %cst_91 = arith.constant dense<0.000000e+00> : vector<8x256xf32>
    %137 = tpu.matmul %136, %134, %cst_91 {dimension_numbers = #tpu.dot_dimension_numbers<[1], [0], [0], [1], [0, 0, 1, 1], [], []>} : vector<8x8xf32>, vector<8x256xf32>, vector<8x256xf32> -> vector<8x256xf32>
    %138 = arith.addf %129, %137 : vector<8x256xf32>
    %c0_92 = arith.constant 0 : index
    %c127_93 = arith.constant 127 : index
    %139 = vector.load %arg10[%c0_92, %c127_93] : memref<8x512xf32, #tpu.memory_space<vmem>>, vector<8x256xf32>
    %cst_94 = arith.constant 0.000000e+00 : f32
    %140 = vector.broadcast %cst_94 : f32 to vector<8x256xf32>
    %141 = vector.shape_cast %18 : vector<1x256xi1> to vector<1x256xi1>
    %142 = vector.broadcast %141 : vector<1x256xi1> to vector<8x256xi1>
    %143 = arith.select %142, %139, %140 : vector<8x256xi1>, vector<8x256xf32>
    %c3_95 = arith.constant 3 : index
    %c0_96 = arith.constant 0 : index
    %c0_97 = arith.constant 0 : index
    %144 = vector.load %arg3[%c3_95, %c0_96, %c0_97] : memref<9x8x8xf32, #tpu.memory_space<vmem>>, vector<1x8x8xf32>
    %145 = vector.shape_cast %144 : vector<1x8x8xf32> to vector<8x8xf32>
    %cst_98 = arith.constant dense<0.000000e+00> : vector<8x256xf32>
    %146 = tpu.matmul %145, %143, %cst_98 {dimension_numbers = #tpu.dot_dimension_numbers<[1], [0], [0], [1], [0, 0, 1, 1], [], []>} : vector<8x8xf32>, vector<8x256xf32>, vector<8x256xf32> -> vector<8x256xf32>
    %147 = arith.addf %138, %146 : vector<8x256xf32>
    %c0_99 = arith.constant 0 : index
    %c128_100 = arith.constant 128 : index
    %148 = vector.load %arg10[%c0_99, %c128_100] : memref<8x512xf32, #tpu.memory_space<vmem>>, vector<8x256xf32>
    %c4_101 = arith.constant 4 : index
    %c0_102 = arith.constant 0 : index
    %c0_103 = arith.constant 0 : index
    %149 = vector.load %arg3[%c4_101, %c0_102, %c0_103] : memref<9x8x8xf32, #tpu.memory_space<vmem>>, vector<1x8x8xf32>
    %150 = vector.shape_cast %149 : vector<1x8x8xf32> to vector<8x8xf32>
    %cst_104 = arith.constant dense<0.000000e+00> : vector<8x256xf32>
    %151 = tpu.matmul %150, %148, %cst_104 {dimension_numbers = #tpu.dot_dimension_numbers<[1], [0], [0], [1], [0, 0, 1, 1], [], []>} : vector<8x8xf32>, vector<8x256xf32>, vector<8x256xf32> -> vector<8x256xf32>
    %152 = arith.addf %147, %151 : vector<8x256xf32>
    %c0_105 = arith.constant 0 : index
    %c129_106 = arith.constant 129 : index
    %153 = vector.load %arg10[%c0_105, %c129_106] : memref<8x512xf32, #tpu.memory_space<vmem>>, vector<8x256xf32>
    %cst_107 = arith.constant 0.000000e+00 : f32
    %154 = vector.broadcast %cst_107 : f32 to vector<8x256xf32>
    %155 = vector.shape_cast %20 : vector<1x256xi1> to vector<1x256xi1>
    %156 = vector.broadcast %155 : vector<1x256xi1> to vector<8x256xi1>
    %157 = arith.select %156, %153, %154 : vector<8x256xi1>, vector<8x256xf32>
    %c5_108 = arith.constant 5 : index
    %c0_109 = arith.constant 0 : index
    %c0_110 = arith.constant 0 : index
    %158 = vector.load %arg3[%c5_108, %c0_109, %c0_110] : memref<9x8x8xf32, #tpu.memory_space<vmem>>, vector<1x8x8xf32>
    %159 = vector.shape_cast %158 : vector<1x8x8xf32> to vector<8x8xf32>
    %cst_111 = arith.constant dense<0.000000e+00> : vector<8x256xf32>
    %160 = tpu.matmul %159, %157, %cst_111 {dimension_numbers = #tpu.dot_dimension_numbers<[1], [0], [0], [1], [0, 0, 1, 1], [], []>} : vector<8x8xf32>, vector<8x256xf32>, vector<8x256xf32> -> vector<8x256xf32>
    %161 = arith.addf %152, %160 : vector<8x256xf32>
    %c0_112 = arith.constant 0 : index
    %c143_113 = arith.constant 143 : index
    %162 = vector.load %arg10[%c0_112, %c143_113] : memref<8x512xf32, #tpu.memory_space<vmem>>, vector<8x256xf32>
    %cst_114 = arith.constant 0.000000e+00 : f32
    %163 = vector.broadcast %cst_114 : f32 to vector<8x256xf32>
    %164 = vector.shape_cast %18 : vector<1x256xi1> to vector<1x256xi1>
    %165 = vector.broadcast %164 : vector<1x256xi1> to vector<8x256xi1>
    %166 = arith.select %165, %162, %163 : vector<8x256xi1>, vector<8x256xf32>
    %c6_115 = arith.constant 6 : index
    %c0_116 = arith.constant 0 : index
    %c0_117 = arith.constant 0 : index
    %167 = vector.load %arg3[%c6_115, %c0_116, %c0_117] : memref<9x8x8xf32, #tpu.memory_space<vmem>>, vector<1x8x8xf32>
    %168 = vector.shape_cast %167 : vector<1x8x8xf32> to vector<8x8xf32>
    %cst_118 = arith.constant dense<0.000000e+00> : vector<8x256xf32>
    %169 = tpu.matmul %168, %166, %cst_118 {dimension_numbers = #tpu.dot_dimension_numbers<[1], [0], [0], [1], [0, 0, 1, 1], [], []>} : vector<8x8xf32>, vector<8x256xf32>, vector<8x256xf32> -> vector<8x256xf32>
    %170 = arith.addf %161, %169 : vector<8x256xf32>
    %c0_119 = arith.constant 0 : index
    %c144_120 = arith.constant 144 : index
    %171 = vector.load %arg10[%c0_119, %c144_120] : memref<8x512xf32, #tpu.memory_space<vmem>>, vector<8x256xf32>
    %c7_121 = arith.constant 7 : index
    %c0_122 = arith.constant 0 : index
    %c0_123 = arith.constant 0 : index
    %172 = vector.load %arg3[%c7_121, %c0_122, %c0_123] : memref<9x8x8xf32, #tpu.memory_space<vmem>>, vector<1x8x8xf32>
    %173 = vector.shape_cast %172 : vector<1x8x8xf32> to vector<8x8xf32>
    %cst_124 = arith.constant dense<0.000000e+00> : vector<8x256xf32>
    %174 = tpu.matmul %173, %171, %cst_124 {dimension_numbers = #tpu.dot_dimension_numbers<[1], [0], [0], [1], [0, 0, 1, 1], [], []>} : vector<8x8xf32>, vector<8x256xf32>, vector<8x256xf32> -> vector<8x256xf32>
    %175 = arith.addf %170, %174 : vector<8x256xf32>
    %c0_125 = arith.constant 0 : index
    %c145_126 = arith.constant 145 : index
    %176 = vector.load %arg10[%c0_125, %c145_126] : memref<8x512xf32, #tpu.memory_space<vmem>>, vector<8x256xf32>
    %cst_127 = arith.constant 0.000000e+00 : f32
    %177 = vector.broadcast %cst_127 : f32 to vector<8x256xf32>
    %178 = vector.shape_cast %20 : vector<1x256xi1> to vector<1x256xi1>
    %179 = vector.broadcast %178 : vector<1x256xi1> to vector<8x256xi1>
    %180 = arith.select %179, %176, %177 : vector<8x256xi1>, vector<8x256xf32>
    %c8_128 = arith.constant 8 : index
    %c0_129 = arith.constant 0 : index
    %c0_130 = arith.constant 0 : index
    %181 = vector.load %arg3[%c8_128, %c0_129, %c0_130] : memref<9x8x8xf32, #tpu.memory_space<vmem>>, vector<1x8x8xf32>
    %182 = vector.shape_cast %181 : vector<1x8x8xf32> to vector<8x8xf32>
    %cst_131 = arith.constant dense<0.000000e+00> : vector<8x256xf32>
    %183 = tpu.matmul %182, %180, %cst_131 {dimension_numbers = #tpu.dot_dimension_numbers<[1], [0], [0], [1], [0, 0, 1, 1], [], []>} : vector<8x8xf32>, vector<8x256xf32>, vector<8x256xf32> -> vector<8x256xf32>
    %184 = arith.addf %175, %183 : vector<8x256xf32>
    %c0_132 = arith.constant 0 : index
    %c0_133 = arith.constant 0 : index
    %185 = vector.load %arg7[%c0_132, %c0_133] : memref<8x1xf32, #tpu.memory_space<vmem>>, vector<8x1xf32>
    %186 = vector.broadcast %185 : vector<8x1xf32> to vector<8x256xf32>
    %187 = arith.addf %184, %186 : vector<8x256xf32>
    %cst_134 = arith.constant 0.00999999977 : f32
    %188 = vector.broadcast %cst_134 : f32 to vector<8x256xf32>
    %189 = arith.mulf %188, %187 : vector<8x256xf32>
    %190 = arith.maximumf %187, %189 : vector<8x256xf32>
    %c0_135 = arith.constant 0 : index
    %c0_136 = arith.constant 0 : index
    %c0_137 = arith.constant 0 : index
    %191 = vector.load %arg8[%c0_135, %c0_136, %c0_137] : memref<1x8x256xf32, #tpu.memory_space<vmem>>, vector<1x8x256xf32>
    %192 = vector.shape_cast %191 : vector<1x8x256xf32> to vector<8x256xf32>
    %193 = vector.shape_cast %190 : vector<8x256xf32> to vector<1x8x256xf32>
    tpu.vector_store %arg8[%c0_135, %c0_136, %c0_137], %193 {strides = array<i32>} : memref<1x8x256xf32, #tpu.memory_space<vmem>>, vector<1x8x256xf32>,
    return
  }
  func.func @transform_0(%arg0: i32) -> (i32, i32, i32) {
    %c0_i32 = arith.constant 0 : i32
    %c0_i32_0 = arith.constant 0 : i32
    %c0_i32_1 = arith.constant 0 : i32
    return %arg0, %c0_i32, %c0_i32_0 : i32, i32, i32
  }
  func.func @transform_1(%arg0: i32) -> (i32, i32, i32) {
    %c0_i32 = arith.constant 0 : i32
    %c0_i32_0 = arith.constant 0 : i32
    %c0_i32_1 = arith.constant 0 : i32
    %c0_i32_2 = arith.constant 0 : i32
    return %c0_i32, %c0_i32_0, %c0_i32_1 : i32, i32, i32
  }
  func.func @transform_2(%arg0: i32) -> (i32, i32, i32) {
    %c0_i32 = arith.constant 0 : i32
    %c0_i32_0 = arith.constant 0 : i32
    %c0_i32_1 = arith.constant 0 : i32
    %c0_i32_2 = arith.constant 0 : i32
    return %c0_i32, %c0_i32_0, %c0_i32_1 : i32, i32, i32
  }
  func.func @transform_3(%arg0: i32) -> (i32, i32) {
    %c0_i32 = arith.constant 0 : i32
    %c0_i32_0 = arith.constant 0 : i32
    %c0_i32_1 = arith.constant 0 : i32
    return %c0_i32, %c0_i32_0 : i32, i32
  }
  func.func @transform_4(%arg0: i32) -> (i32, i32) {
    %c0_i32 = arith.constant 0 : i32
    %c0_i32_0 = arith.constant 0 : i32
    %c0_i32_1 = arith.constant 0 : i32
    return %c0_i32, %c0_i32_0 : i32, i32
  }
  func.func @transform_5(%arg0: i32) -> (i32, i32) {
    %c0_i32 = arith.constant 0 : i32
    %c0_i32_0 = arith.constant 0 : i32
    %c0_i32_1 = arith.constant 0 : i32
    return %c0_i32, %c0_i32_0 : i32, i32
  }
  func.func @transform_6(%arg0: i32) -> (i32, i32) {
    %c0_i32 = arith.constant 0 : i32
    %c0_i32_0 = arith.constant 0 : i32
    %c0_i32_1 = arith.constant 0 : i32
    return %c0_i32, %c0_i32_0 : i32, i32
  }
  func.func @transform_7(%arg0: i32) -> (i32, i32, i32) {
    %c0_i32 = arith.constant 0 : i32
    %c0_i32_0 = arith.constant 0 : i32
    %c0_i32_1 = arith.constant 0 : i32
    return %arg0, %c0_i32, %c0_i32_0 : i32, i32, i32
  }
}

</mosaic_0001>

<llo_original>
// kernel: tpu_custom_call.1
$region0: #{tpu_custom_call.1}
  #allocation0 [shape = 'u32[]', space=smem, size = 0x4, offset = 0x4, fixed_abs, tag = 'smem constant byte address 0x4 - core index']
  #allocation1 [shape = 'u32[144,128]{1,0:T(1,128)}', space=vmem, size = 0x12000, scoped, tag = 'internal scratch']
  #allocation2 [shape = 'f32[4,512]{1,0:T(4,128)}', space=vmem, size = 0x2000, scoped, tag = 'scratch operand']
  #allocation3 [shape = 'f32[8,512]{1,0:T(8,128)}', space=vmem, size = 0x4000, scoped, tag = 'scratch operand']
  %s0 = inlined_call_operand.vmem [shape: f32[2,4,256], index: 0, kind: input, shape index: {}]
  %s1 = inlined_call_operand.vmem [shape: f32[9,8,4], index: 1, kind: input, shape index: {}]
  %s2 = inlined_call_operand.vmem [shape: f32[9,8,8], index: 2, kind: input, shape index: {}]
  %s3 = inlined_call_operand.vmem [shape: f32[4,1], index: 3, kind: input, shape index: {}]
  %s4 = inlined_call_operand.vmem [shape: f32[4,1], index: 4, kind: input, shape index: {}]
  %s5 = inlined_call_operand.vmem [shape: f32[8,1], index: 5, kind: input, shape index: {}]
  %s6 = inlined_call_operand.vmem [shape: f32[8,1], index: 6, kind: input, shape index: {}]
  %s7 = inlined_call_operand.hbm [shape: f32[2,8,256], index: 7, kind: output, shape index: {}]
  %s8 = sld [smem:[#allocation0]]
  $region61: #{tpu_custom_call.1} parent=0
    _
  %s10 = ssub.s32 1, %s8
  %s11 = scalar_select 0, %s10, %s8
  $region1: #{tpu_custom_call.1} parent=0
    #allocation4 [shape = 'u8[16384]{0}', space=vmem, size = 0x4000, scoped, tag = 'output window, operand 0']
    #allocation5 [shape = 's32[2]{0}', space=sflag, size = 0x8, scoped, tag = 'scoped memory for tpu_custom_call.1']
    %12 = vsyncpa [#allocation5], 0
    %s13 = scalar_lea.sflag [#allocation5], 1
    %14 = vsyncpa %s13, 0
    loop: start=0, step=1, limit=4
    $region2: #{tpu_custom_call.1} parent=1 // loop_pre_header
      _
    $region3: #{tpu_custom_call.1} parent=1 // loop_header
      %s16 = sphi 0, %s20
      %p17 = scmp.ge.s32.totalorder %s16, 4
      %s26 = sphi 0, %s28
      %s29 = sphi 0, %s26
      %s30 = sphi 0, %s29
      %s46 = sphi 0, %s30
      %s50 = sphi 0, %s50
      %s52 = sphi 0, %s50
      %s53 = sphi 0, %s52
      %s67 = sphi 0, %s53
      %s71 = sphi 0, %s71
      %s73 = sphi 0, %s71
      %s74 = sphi 0, %s73
      %s88 = sphi 0, %s74
      %s92 = sphi 0, %s92
      %s94 = sphi 0, %s92
      %s95 = sphi 0, %s94
      %s109 = sphi 0, %s95
      %s113 = sphi 0, %s113
      %s115 = sphi 0, %s113
      %s116 = sphi 0, %s115
      %s130 = sphi 0, %s116
      %s134 = sphi 0, %s134
      %s136 = sphi 0, %s134
      %s137 = sphi 0, %s136
      %s151 = sphi 0, %s137
      %s155 = sphi 0, %s155
      %s157 = sphi 0, %s155
      %s158 = sphi 0, %s157
      %s172 = sphi 0, %s158
      %s178 = sphi 0, %s180
      %s181 = sphi 0, %s178
      %s182 = sphi 0, %s181
      %s198 = sphi 0, %s182
    $region4: #{tpu_custom_call.1} parent=1 // loop_header_branch
      %19 = sbr.rel (%p17) target = $region8
    $region5: #{tpu_custom_call.1} parent=1 // loop_body
      %s21 = ssub.s32 %s16, 1
      %s22 = ssub.s32 %s16, 2
      %s23 = sadd.s32 %s16, 1
      %s24 = ssub.s32 %s16, %s23
      %p25 = scmp.eq.s32.totalorder %s24, 0
      %s27 = sadd.s32 %s26, 1
      %s28 = scalar_select %p25, %s26, %s27
      %p31 = pneg %p25
      %p32 = scmp.eq.s32.totalorder %s16, 1
      %p33 = por %p31, %p32
      %p34 = scmp.ne.s32.totalorder %s26, %s29
      %p35 = scmp.eq.s32.totalorder %s16, 0
      %p36 = por %p34, %p35
      %p37 = scmp.ne.s32.totalorder %s26, %s29
      %p38 = scmp.eq.s32.totalorder %s21, 1
      %p39 = por %p37, %p38
      %p40 = scmp.ne.s32.totalorder %s29, %s30
      %p41 = scmp.eq.s32.totalorder %s21, 0
      %p42 = por %p40, %p41
      %p43 = scmp.ne.s32.totalorder %s29, %s30
      %p44 = scmp.eq.s32.totalorder %s22, 1
      %p45 = por %p43, %p44
      %p47 = scmp.ne.s32.totalorder %s30, %s46
      %p48 = scmp.eq.s32.totalorder %s22, 0
      %p49 = por %p47, %p48
      %s51 = sadd.s32 %s50, 1
      %p54 = scmp.eq.s32.totalorder %s16, 1
      %p55 = scmp.ne.s32.totalorder %s50, %s52
      %p56 = scmp.eq.s32.totalorder %s16, 0
      %p57 = por %p55, %p56
      %p58 = scmp.ne.s32.totalorder %s50, %s52
      %p59 = scmp.eq.s32.totalorder %s21, 1
      %p60 = por %p58, %p59
      %p61 = scmp.ne.s32.totalorder %s52, %s53
      %p62 = scmp.eq.s32.totalorder %s21, 0
      %p63 = por %p61, %p62
      %p64 = scmp.ne.s32.totalorder %s52, %s53
      %p65 = scmp.eq.s32.totalorder %s22, 1
      %p66 = por %p64, %p65
      %p68 = scmp.ne.s32.totalorder %s53, %s67
      %p69 = scmp.eq.s32.totalorder %s22, 0
      %p70 = por %p68, %p69
      %s72 = sadd.s32 %s71, 1
      %p75 = scmp.eq.s32.totalorder %s16, 1
      %p76 = scmp.ne.s32.totalorder %s71, %s73
      %p77 = scmp.eq.s32.totalorder %s16, 0
      %p78 = por %p76, %p77
      %p79 = scmp.ne.s32.totalorder %s71, %s73
      %p80 = scmp.eq.s32.totalorder %s21, 1
      %p81 = por %p79, %p80
      %p82 = scmp.ne.s32.totalorder %s73, %s74
      %p83 = scmp.eq.s32.totalorder %s21, 0
      %p84 = por %p82, %p83
      %p85 = scmp.ne.s32.totalorder %s73, %s74
      %p86 = scmp.eq.s32.totalorder %s22, 1
      %p87 = por %p85, %p86
      %p89 = scmp.ne.s32.totalorder %s74, %s88
      %p90 = scmp.eq.s32.totalorder %s22, 0
      %p91 = por %p89, %p90
      %s93 = sadd.s32 %s92, 1
      %p96 = scmp.eq.s32.totalorder %s16, 1
      %p97 = scmp.ne.s32.totalorder %s92, %s94
      %p98 = scmp.eq.s32.totalorder %s16, 0
      %p99 = por %p97, %p98
      %p100 = scmp.ne.s32.totalorder %s92, %s94
      %p101 = scmp.eq.s32.totalorder %s21, 1
      %p102 = por %p100, %p101
      %p103 = scmp.ne.s32.totalorder %s94, %s95
      %p104 = scmp.eq.s32.totalorder %s21, 0
      %p105 = por %p103, %p104
      %p106 = scmp.ne.s32.totalorder %s94, %s95
      %p107 = scmp.eq.s32.totalorder %s22, 1
      %p108 = por %p106, %p107
      %p110 = scmp.ne.s32.totalorder %s95, %s109
      %p111 = scmp.eq.s32.totalorder %s22, 0
      %p112 = por %p110, %p111
      %s114 = sadd.s32 %s113, 1
      %p117 = scmp.eq.s32.totalorder %s16, 1
      %p118 = scmp.ne.s32.totalorder %s113, %s115
      %p119 = scmp.eq.s32.totalorder %s16, 0
      %p120 = por %p118, %p119
      %p121 = scmp.ne.s32.totalorder %s113, %s115
      %p122 = scmp.eq.s32.totalorder %s21, 1
      %p123 = por %p121, %p122
      %p124 = scmp.ne.s32.totalorder %s115, %s116
      %p125 = scmp.eq.s32.totalorder %s21, 0
      %p126 = por %p124, %p125
      %p127 = scmp.ne.s32.totalorder %s115, %s116
      %p128 = scmp.eq.s32.totalorder %s22, 1
      %p129 = por %p127, %p128
      %p131 = scmp.ne.s32.totalorder %s116, %s130
      %p132 = scmp.eq.s32.totalorder %s22, 0
      %p133 = por %p131, %p132
      %s135 = sadd.s32 %s134, 1
      %p138 = scmp.eq.s32.totalorder %s16, 1
      %p139 = scmp.ne.s32.totalorder %s134, %s136
      %p140 = scmp.eq.s32.totalorder %s16, 0
      %p141 = por %p139, %p140
      %p142 = scmp.ne.s32.totalorder %s134, %s136
      %p143 = scmp.eq.s32.totalorder %s21, 1
      %p144 = por %p142, %p143
      %p145 = scmp.ne.s32.totalorder %s136, %s137
      %p146 = scmp.eq.s32.totalorder %s21, 0
      %p147 = por %p145, %p146
      %p148 = scmp.ne.s32.totalorder %s136, %s137
      %p149 = scmp.eq.s32.totalorder %s22, 1
      %p150 = por %p148, %p149
      %p152 = scmp.ne.s32.totalorder %s137, %s151
      %p153 = scmp.eq.s32.totalorder %s22, 0
      %p154 = por %p152, %p153
      %s156 = sadd.s32 %s155, 1
      %p159 = scmp.eq.s32.totalorder %s16, 1
      %p160 = scmp.ne.s32.totalorder %s155, %s157
      %p161 = scmp.eq.s32.totalorder %s16, 0
      %p162 = por %p160, %p161
      %p163 = scmp.ne.s32.totalorder %s155, %s157
      %p164 = scmp.eq.s32.totalorder %s21, 1
      %p165 = por %p163, %p164
      %p166 = scmp.ne.s32.totalorder %s157, %s158
      %p167 = scmp.eq.s32.totalorder %s21, 0
      %p168 = por %p166, %p167
      %p169 = scmp.ne.s32.totalorder %s157, %s158
      %p170 = scmp.eq.s32.totalorder %s22, 1
      %p171 = por %p169, %p170
      %p173 = scmp.ne.s32.totalorder %s158, %s172
      %p174 = scmp.eq.s32.totalorder %s22, 0
      %p175 = por %p173, %p174
      %s176 = ssub.s32 %s16, %s23
      %p177 = scmp.eq.s32.totalorder %s176, 0
      %s179 = sadd.s32 %s178, 1
      %s180 = scalar_select %p177, %s178, %s179
      %p183 = pneg %p177
      %p184 = scmp.eq.s32.totalorder %s16, 1
      %p185 = por %p183, %p184
      %p186 = scmp.ne.s32.totalorder %s178, %s181
      %p187 = scmp.eq.s32.totalorder %s16, 0
      %p188 = por %p186, %p187
      %p189 = scmp.ne.s32.totalorder %s178, %s181
      %p190 = scmp.eq.s32.totalorder %s21, 1
      %p191 = por %p189, %p190
      %p192 = scmp.ne.s32.totalorder %s181, %s182
      %p193 = scmp.eq.s32.totalorder %s21, 0
      %p194 = por %p192, %p193
      %p195 = scmp.ne.s32.totalorder %s181, %s182
      %p196 = scmp.eq.s32.totalorder %s22, 1
      %p197 = por %p195, %p196
      %p199 = scmp.ne.s32.totalorder %s182, %s198
      %p200 = scmp.eq.s32.totalorder %s22, 0
      %p201 = por %p199, %p200
      %p202 = scmp.le.s32.totalorder 1, %s16
      %p203 = scmp.lt.s32.totalorder %s16, 3
      %p204 = pnand %p202, %p203
      %p205 = pneg %p204
      // Predicated region
      $region9: #{tpu_custom_call.1} parent=5 // pred_check
        _
      $region10: #{tpu_custom_call.1} parent=5 // pred_check_branch
        %207 = sbr.rel (%p204) target = $region12
      $region11: #{tpu_custom_call.1} parent=5 // pred_region
        %s208 = ssub.s32 %s16, 1
        // Predicated region
        $region13: #{tpu_custom_call.1} parent=11 // pred_check
          %p209 = pneg %p63
        $region14: #{tpu_custom_call.1} parent=11 // pred_check_branch
          %211 = sbr.rel (%p209) target = $region16
        $region15: #{tpu_custom_call.1} parent=11 // pred_region
          _
        $region16: #{tpu_custom_call.1} parent=11 // pred_fallthru
          _
        // Predicated region
        $region17: #{tpu_custom_call.1} parent=11 // pred_check
          %p212 = pneg %p84
        $region18: #{tpu_custom_call.1} parent=11 // pred_check_branch
          %214 = sbr.rel (%p212) target = $region20
        $region19: #{tpu_custom_call.1} parent=11 // pred_region
          _
        $region20: #{tpu_custom_call.1} parent=11 // pred_fallthru
          _
        // Predicated region
        $region21: #{tpu_custom_call.1} parent=11 // pred_check
          %p215 = pneg %p105
        $region22: #{tpu_custom_call.1} parent=11 // pred_check_branch
          %217 = sbr.rel (%p215) target = $region24
        $region23: #{tpu_custom_call.1} parent=11 // pred_region
          _
        $region24: #{tpu_custom_call.1} parent=11 // pred_fallthru
          _
        // Predicated region
        $region25: #{tpu_custom_call.1} parent=11 // pred_check
          %p218 = pneg %p126
        $region26: #{tpu_custom_call.1} parent=11 // pred_check_branch
          %220 = sbr.rel (%p218) target = $region28
        $region27: #{tpu_custom_call.1} parent=11 // pred_region
          _
        $region28: #{tpu_custom_call.1} parent=11 // pred_fallthru
          _
        // Predicated region
        $region29: #{tpu_custom_call.1} parent=11 // pred_check
          %p221 = pneg %p147
        $region30: #{tpu_custom_call.1} parent=11 // pred_check_branch
          %223 = sbr.rel (%p221) target = $region32
        $region31: #{tpu_custom_call.1} parent=11 // pred_region
          _
        $region32: #{tpu_custom_call.1} parent=11 // pred_fallthru
          _
        // Predicated region
        $region33: #{tpu_custom_call.1} parent=11 // pred_check
          %p224 = pneg %p168
        $region34: #{tpu_custom_call.1} parent=11 // pred_check_branch
          %226 = sbr.rel (%p224) target = $region36
        $region35: #{tpu_custom_call.1} parent=11 // pred_region
          _
        $region36: #{tpu_custom_call.1} parent=11 // pred_fallthru
          _
      $region12: #{tpu_custom_call.1} parent=5 // pred_fallthru
        _
      %p227 = scmp.lt.s32.totalorder %s16, 2
      // Predicated region
      $region37: #{tpu_custom_call.1} parent=5 // pred_check
        %p228 = pneg %p227
      $region38: #{tpu_custom_call.1} parent=5 // pred_check_branch
        %230 = sbr.rel (%p228) target = $region40
      $region39: #{tpu_custom_call.1} parent=5 // pred_region
        // Predicated region
        $region41: #{tpu_custom_call.1} parent=39 // pred_check
          %p231 = pneg %p36
        $region42: #{tpu_custom_call.1} parent=39 // pred_check_branch
          %233 = sbr.rel (%p231) target = $region44
        $region43: #{tpu_custom_call.1} parent=39 // pred_region
          %p234 = scmp.lt.s32.totalorder %s16, 1
          %s235 = scalar_select %p234, %s16, 1
          %s236 = smul.addr %s235, 2
          %s237 = smul.addr %s236, 4
          %s238 = scalar_lea.vmem %s0, %s237
        $region44: #{tpu_custom_call.1} parent=39 // pred_fallthru
          _
      $region40: #{tpu_custom_call.1} parent=5 // pred_fallthru
        _
      %p239 = scmp.le.s32.totalorder 1, %s16
      %p240 = scmp.lt.s32.totalorder %s16, 3
      %p241 = pnand %p239, %p240
      %p242 = pneg %p241
      // Predicated region
      $region45: #{tpu_custom_call.1} parent=5 // pred_check
        _
      $region46: #{tpu_custom_call.1} parent=5 // pred_check_branch
        %244 = sbr.rel (%p241) target = $region48
      $region47: #{tpu_custom_call.1} parent=5 // pred_region
        %s245 = ssub.s32 %s16, 1
        %p246 = scmp.lt.s32.totalorder %s21, 1
        %s247 = scalar_select %p246, %s21, 1
        %s248 = smul.addr %s247, 2
        %s249 = smul.addr %s248, 4
        %s250 = scalar_lea.vmem %s0, %s249
        %p251 = pneg %p42
        %p252 = pneg %p39
        %p253 = pneg %p63
        %p254 = pneg %p60
        %p255 = pneg %p84
        %p256 = pneg %p81
        %p257 = pneg %p105
        %p258 = pneg %p102
        %p259 = pneg %p126
        %p260 = pneg %p123
        %p261 = pneg %p147
        %p262 = pneg %p144
        %p263 = pneg %p168
        %p264 = pneg %p165
        %p265 = pneg %p194
        %p266 = pneg %p191
        %s267 = sand.u32 %s181, 1
        %s268 = scalar_lea.sflag [#allocation5], %s267
        %s269 = sand.u32 %s181, 1
        %s270 = smul.addr %s269, 16
        %s271 = scalar_lea.vmem [#allocation4], %s270
        %p272 = scmp.lt.s32.totalorder %s21, 1
        %s273 = scalar_select %p272, %s21, 1
        %s274 = smul.addr %s273, 2
        %s275 = smul.addr %s274, 4
        %s276 = scalar_lea.vmem %s0, %s275
        %v277 = vlaneseq
        %v278 = vand.u32 %v277, 127
        %v279 = vadd.s32 %v278, 128
        %vm280 = vcmp.lt.s32.totalorder %v278, 0
        %v281 = vsub.s32 0, %v278
        %v282 = vsel %vm280, %v281, %v278
        %v283 = vshrl.u32 %v282, 4
        %v284 = vand.u32 %v282, 15
        %v285 = vsub.s32 0, %v284
        %v286 = vsel %vm280, %v285, %v284
        %vm287 = vcmp.lt.s32.totalorder %v279, 0
        %v288 = vsub.s32 0, %v279
        %v289 = vsel %vm287, %v288, %v279
        %v290 = vshrl.u32 %v289, 4
        %v291 = vand.u32 %v289, 15
        %v292 = vsub.s32 0, %v291
        %v293 = vsel %vm287, %v292, %v291
        %vm294 = vcmp.ne.s32.totalorder %v286, 0
        %vm295 = vcmp.ne.s32.totalorder %v293, 0
        %vm296 = vcmp.lt.s32.totalorder %v286, 0
        %vm297 = vcmp.lt.s32.totalorder %v293, 0
        %vm298 = vmand %vm296, %vm294
        %vm299 = vmand %vm297, %vm295
        %v300 = vadd.s32 %v286, 16
        %v301 = vadd.s32 %v293, 16
        %v302 = vsel %vm298, %v300, %v286
        %v303 = vsel %vm299, %v301, %v293
        %vm304 = vcmp.gt.s32.totalorder %v302, 0
        %vm305 = vcmp.gt.s32.totalorder %v303, 0
        %vm306 = vcmp.lt.s32.totalorder %v302, 15
        %vm307 = vcmp.lt.s32.totalorder %v303, 15
        %v308 = vld [vmem:[%s276] sm:$0xff]
        %v309 = vld [vmem:[%s3] sm:$0xf]
        %311 = vset.pattern.permute.xlu0 0
        %312 = vperm.xlu0 %311, %v309
        %v313 = vpop.permute.xlu0 %312
        %v315 = vunpack.c.l.s4 839922192
        %v316 = vunpack.c.0.s8 %v315
        %v317 = vlaneseq
        %v318 = vshrl.u32 %v317, 7
        %v319 = vsub.s32 %v316, %v318
        %v320 = vrot.slane %v313, %v319
        %v322 = vmul.f32 %v308, %v320
        %v323 = vld [vmem:[%s4] sm:$0xf]
        %325 = vset.pattern.permute.xlu0 0
        %326 = vperm.xlu0 %325, %v323
        %v327 = vpop.permute.xlu0 %326
        %v329 = vunpack.c.l.s4 839922192
        %v330 = vunpack.c.0.s8 %v329
        %v331 = vlaneseq
        %v332 = vshrl.u32 %v331, 7
        %v333 = vsub.s32 %v330, %v332
        %v334 = vrot.slane %v327, %v333
        %v336 = vadd.f32 %v322, %v334
        %337 = vst [vmem:[#allocation2] sm:$0xf] 0.0
        %338 = vst [vmem:[#allocation2 + $0xc] sm:$0xf] 0.0
        %339 = vst [vmem:[#allocation2 + $0x4] sm:$0xff] %v336
        %v340 = vld [vmem:[#allocation2] sm:$0xff]
        %v341 = vld [vmem:[#allocation2 + $0x8] sm:$0xf]
        %v342 = vsel %vm304, 1, 0
        %v343 = vsel %vm305, 1, 0
        %vm344 = vcmp.eq.s32.totalorder %v342, 1
        %vm345 = vcmp.eq.s32.totalorder %v343, 1
        %v348 = vcombine.high %v340, %v340
        %349 = vrot.lane.b32.xlu0 %v340, 17
        %v350 = vpop.permute.xlu0 %349
        %351 = vrot.lane.b32.xlu0 %v348, 17
        %v352 = vpop.permute.xlu0 %351
        %353 = vrot.lane.b32.xlu0 %v341, 17
        %v354 = vpop.permute.xlu0 %353
        %vm355 = vcmask 138240
        %v356 = vsel %vm355, %v350, %v352
        %v357 = vsel %vm355, %v352, %v354
        %v360 = vsel %vm344, %v356, 0.0
        %v361 = vsel %vm345, %v357, 0.0
        %v362 = vld [vmem:[%s1] sm:$0xff]
        %s363 = scalar_lea.vmem %s1, 8
        %v364 = vld [vmem:[%s363] sm:$0xff]
        %365 = vrot.lane.b32.xlu0 %v340, 16
        %v366 = vpop.permute.xlu0 %365
        %367 = vrot.lane.b32.xlu0 %v348, 16
        %v368 = vpop.permute.xlu0 %367
        %369 = vrot.lane.b32.xlu0 %v341, 16
        %v370 = vpop.permute.xlu0 %369
        %vm371 = vcmask 130048
        %v372 = vsel %vm371, %v366, %v368
        %v373 = vsel %vm371, %v368, %v370
        %vm374 = vcmask 31744
        %v376 = vsel %vm374, %v364, 0
        %vm378 = vcmask 1043456
        %v379 = vsel %vm378, %v372, 0
        %v381 = vsel %vm378, %v373, 0
        %383 = vmatprep.subr.mxu0 %v381
        %384 = vmatpush1.msra.mxu0 %v379
        %385 = vmatprep.subr.mxu0 0.0
        %386 = vmatpush1.msra.mxu0 0.0
        %387 = vmatprep.subr.mxu0 0.0
        %388 = vmatpush1.msra.mxu0 0.0
        %389 = vmatprep.subr.mxu0 0.0
        %390 = vmatpush1.msra.mxu0 0.0
        %391 = vmatprep.subr.mxu0 0.0
        %392 = vmatpush1.msra.mxu0 0.0
        %393 = vmatprep.subr.mxu0 0.0
        %394 = vmatpush1.msra.mxu0 0.0
        %395 = vmatprep.subr.mxu0 0.0
        %396 = vmatpush1.msra.mxu0 0.0
        %397 = vmatprep.subr.mxu0 0.0
        %398 = vmatpush1.msra.mxu0 0.0
        %399 = vmatprep.subr.mxu0 0.0
        %400 = vmatpush1.msra.mxu0 0.0
        %401 = vmatprep.subr.mxu0 0.0
        %402 = vmatpush1.msra.mxu0 0.0
        %403 = vmatprep.subr.mxu0 0.0
        %404 = vmatpush1.msra.mxu0 0.0
        %405 = vmatprep.subr.mxu0 0.0
        %406 = vmatpush1.msra.mxu0 0.0
        %407 = vmatprep.subr.mxu0 0.0
        %408 = vmatpush1.msra.mxu0 0.0
        %409 = vmatprep.subr.mxu0 0.0
        %410 = vmatpush1.msra.mxu0 0.0
        %411 = vmatprep.subr.mxu0 0.0
        %412 = vmatpush1.msra.mxu0 0.0
        %413 = vmatprep.subr.mxu0 0.0
        %414 = vmatpush1.msra.mxu0 0.0
        %415 = vmatprep.subr.mxu0 0.0
        %416 = vmatpush1.msra.mxu0 0.0
        %417 = vmatprep.subr.mxu0 0.0
        %418 = vmatpush1.msra.mxu0 0.0
        %419 = vmatprep.subr.mxu0 0.0
        %420 = vmatpush1.msra.mxu0 0.0
        %421 = vmatprep.subr.mxu0 0.0
        %422 = vmatpush1.msra.mxu0 0.0
        %423 = vmatprep.subr.mxu0 0.0
        %424 = vmatpush1.msra.mxu0 0.0
        %425 = vmatprep.subr.mxu0 0.0
        %426 = vmatpush1.msra.mxu0 0.0
        %427 = vmatprep.subr.mxu0 0.0
        %428 = vmatpush1.msra.mxu0 0.0
        %429 = vmatprep.subr.mxu0 0.0
        %430 = vmatpush1.msra.mxu0 0.0
        %431 = vmatprep.subr.mxu0 0.0
        %432 = vmatpush1.msra.mxu0 0.0
        %433 = vmatprep.subr.mxu0 0.0
        %434 = vmatpush1.msra.mxu0 0.0
        %435 = vmatprep.subr.mxu0 0.0
        %436 = vmatpush1.msra.mxu0 0.0
        %437 = vmatprep.subr.mxu0 0.0
        %438 = vmatpush1.msra.mxu0 0.0
        %439 = vmatprep.subr.mxu0 0.0
        %440 = vmatpush1.msra.mxu0 0.0
        %441 = vmatprep.subr.mxu0 0.0
        %442 = vmatpush1.msra.mxu0 0.0
        %443 = vmatprep.subr.mxu0 0.0
        %444 = vmatpush1.msra.mxu0 0.0
        %445 = vmatprep.subr.mxu0 0.0
        %446 = vmatpush1.msra.mxu0 0.0
        %447 = vmatprep.mubr.f32.mxu0 0.0
        %448 = vmatmul.mubr.f32.gmra.mrb[0].mxu0 %v376
        %v449 = vpop.f32.mrb[0].mxu0
        %v450 = vadd.f32 0.0, %v449
        %v451 = vpop.f32.mrb[0].mxu0
        %v452 = vadd.f32 0.0, %v451
        %453 = vdwg.mxu0
        %v455 = vsel %vm374, %v362, 0
        %v458 = vsel %vm378, %v360, 0
        %v461 = vsel %vm378, %v361, 0
        %463 = vmatprep.subr.mxu0 %v461
        %464 = vmatpush1.msra.mxu0 %v458
        %465 = vmatprep.subr.mxu0 0.0
        %466 = vmatpush1.msra.mxu0 0.0
        %467 = vmatprep.subr.mxu0 0.0
        %468 = vmatpush1.msra.mxu0 0.0
        %469 = vmatprep.subr.mxu0 0.0
        %470 = vmatpush1.msra.mxu0 0.0
        %471 = vmatprep.subr.mxu0 0.0
        %472 = vmatpush1.msra.mxu0 0.0
        %473 = vmatprep.subr.mxu0 0.0
        %474 = vmatpush1.msra.mxu0 0.0
        %475 = vmatprep.subr.mxu0 0.0
        %476 = vmatpush1.msra.mxu0 0.0
        %477 = vmatprep.subr.mxu0 0.0
        %478 = vmatpush1.msra.mxu0 0.0
        %479 = vmatprep.subr.mxu0 0.0
        %480 = vmatpush1.msra.mxu0 0.0
        %481 = vmatprep.subr.mxu0 0.0
        %482 = vmatpush1.msra.mxu0 0.0
        %483 = vmatprep.subr.mxu0 0.0
        %484 = vmatpush1.msra.mxu0 0.0
        %485 = vmatprep.subr.mxu0 0.0
        %486 = vmatpush1.msra.mxu0 0.0
        %487 = vmatprep.subr.mxu0 0.0
        %488 = vmatpush1.msra.mxu0 0.0
        %489 = vmatprep.subr.mxu0 0.0
        %490 = vmatpush1.msra.mxu0 0.0
        %491 = vmatprep.subr.mxu0 0.0
        %492 = vmatpush1.msra.mxu0 0.0
        %493 = vmatprep.subr.mxu0 0.0
        %494 = vmatpush1.msra.mxu0 0.0
        %495 = vmatprep.subr.mxu0 0.0
        %496 = vmatpush1.msra.mxu0 0.0
        %497 = vmatprep.subr.mxu0 0.0
        %498 = vmatpush1.msra.mxu0 0.0
        %499 = vmatprep.subr.mxu0 0.0
        %500 = vmatpush1.msra.mxu0 0.0
        %501 = vmatprep.subr.mxu0 0.0
        %502 = vmatpush1.msra.mxu0 0.0
        %503 = vmatprep.subr.mxu0 0.0
        %504 = vmatpush1.msra.mxu0 0.0
        %505 = vmatprep.subr.mxu0 0.0
        %506 = vmatpush1.msra.mxu0 0.0
        %507 = vmatprep.subr.mxu0 0.0
        %508 = vmatpush1.msra.mxu0 0.0
        %509 = vmatprep.subr.mxu0 0.0
        %510 = vmatpush1.msra.mxu0 0.0
        %511 = vmatprep.subr.mxu0 0.0
        %512 = vmatpush1.msra.mxu0 0.0
        %513 = vmatprep.subr.mxu0 0.0
        %514 = vmatpush1.msra.mxu0 0.0
        %515 = vmatprep.subr.mxu0 0.0
        %516 = vmatpush1.msra.mxu0 0.0
        %517 = vmatprep.subr.mxu0 0.0
        %518 = vmatpush1.msra.mxu0 0.0
        %519 = vmatprep.subr.mxu0 0.0
        %520 = vmatpush1.msra.mxu0 0.0
        %521 = vmatprep.subr.mxu0 0.0
        %522 = vmatpush1.msra.mxu0 0.0
        %523 = vmatprep.subr.mxu0 0.0
        %524 = vmatpush1.msra.mxu0 0.0
        %525 = vmatprep.subr.mxu0 0.0
        %526 = vmatpush1.msra.mxu0 0.0
        %527 = vmatprep.mubr.f32.mxu0 0.0
        %528 = vmatmul.mubr.f32.gmra.mrb[0].mxu0 %v455
        %v529 = vpop.f32.mrb[0].mxu0
        %v530 = vadd.f32 %v450, %v529
        %v531 = vpop.f32.mrb[0].mxu0
        %v532 = vadd.f32 %v452, %v531
        %533 = vdwg.mxu0
        %v534 = vld [vmem:[#allocation2] sm:$0xff]
        %v535 = vld [vmem:[#allocation2 + $0x8] sm:$0xf]
        %v536 = vsel %vm306, 1, 0
        %v537 = vsel %vm307, 1, 0
        %vm538 = vcmp.eq.s32.totalorder %v536, 1
        %vm539 = vcmp.eq.s32.totalorder %v537, 1
        %v542 = vcombine.high %v534, %v534
        %543 = vrot.lane.b32.xlu0 %v534, 15
        %v544 = vpop.permute.xlu0 %543
        %545 = vrot.lane.b32.xlu0 %v542, 15
        %v546 = vpop.permute.xlu0 %545
        %547 = vrot.lane.b32.xlu0 %v535, 15
        %v548 = vpop.permute.xlu0 %547
        %vm549 = vcmask 121856
        %v550 = vsel %vm549, %v544, %v546
        %v551 = vsel %vm549, %v546, %v548
        %v554 = vsel %vm538, %v550, 0.0
        %v555 = vsel %vm539, %v551, 0.0
        %s556 = scalar_lea.vmem %s1, 16
        %v557 = vld [vmem:[%s556] sm:$0xff]
        %v559 = vsel %vm374, %v557, 0
        %v562 = vsel %vm378, %v554, 0
        %v565 = vsel %vm378, %v555, 0
        %567 = vmatprep.subr.mxu0 %v565
        %568 = vmatpush1.msra.mxu0 %v562
        %569 = vmatprep.subr.mxu0 0.0
        %570 = vmatpush1.msra.mxu0 0.0
        %571 = vmatprep.subr.mxu0 0.0
        %572 = vmatpush1.msra.mxu0 0.0
        %573 = vmatprep.subr.mxu0 0.0
        %574 = vmatpush1.msra.mxu0 0.0
        %575 = vmatprep.subr.mxu0 0.0
        %576 = vmatpush1.msra.mxu0 0.0
        %577 = vmatprep.subr.mxu0 0.0
        %578 = vmatpush1.msra.mxu0 0.0
        %579 = vmatprep.subr.mxu0 0.0
        %580 = vmatpush1.msra.mxu0 0.0
        %581 = vmatprep.subr.mxu0 0.0
        %582 = vmatpush1.msra.mxu0 0.0
        %583 = vmatprep.subr.mxu0 0.0
        %584 = vmatpush1.msra.mxu0 0.0
        %585 = vmatprep.subr.mxu0 0.0
        %586 = vmatpush1.msra.mxu0 0.0
        %587 = vmatprep.subr.mxu0 0.0
        %588 = vmatpush1.msra.mxu0 0.0
        %589 = vmatprep.subr.mxu0 0.0
        %590 = vmatpush1.msra.mxu0 0.0
        %591 = vmatprep.subr.mxu0 0.0
        %592 = vmatpush1.msra.mxu0 0.0
        %593 = vmatprep.subr.mxu0 0.0
        %594 = vmatpush1.msra.mxu0 0.0
        %595 = vmatprep.subr.mxu0 0.0
        %596 = vmatpush1.msra.mxu0 0.0
        %597 = vmatprep.subr.mxu0 0.0
        %598 = vmatpush1.msra.mxu0 0.0
        %599 = vmatprep.subr.mxu0 0.0
        %600 = vmatpush1.msra.mxu0 0.0
        %601 = vmatprep.subr.mxu0 0.0
        %602 = vmatpush1.msra.mxu0 0.0
        %603 = vmatprep.subr.mxu0 0.0
        %604 = vmatpush1.msra.mxu0 0.0
        %605 = vmatprep.subr.mxu0 0.0
        %606 = vmatpush1.msra.mxu0 0.0
        %607 = vmatprep.subr.mxu0 0.0
        %608 = vmatpush1.msra.mxu0 0.0
        %609 = vmatprep.subr.mxu0 0.0
        %610 = vmatpush1.msra.mxu0 0.0
        %611 = vmatprep.subr.mxu0 0.0
        %612 = vmatpush1.msra.mxu0 0.0
        %613 = vmatprep.subr.mxu0 0.0
        %614 = vmatpush1.msra.mxu0 0.0
        %615 = vmatprep.subr.mxu0 0.0
        %616 = vmatpush1.msra.mxu0 0.0
        %617 = vmatprep.subr.mxu0 0.0
        %618 = vmatpush1.msra.mxu0 0.0
        %619 = vmatprep.subr.mxu0 0.0
        %620 = vmatpush1.msra.mxu0 0.0
        %621 = vmatprep.subr.mxu0 0.0
        %622 = vmatpush1.msra.mxu0 0.0
        %623 = vmatprep.subr.mxu0 0.0
        %624 = vmatpush1.msra.mxu0 0.0
        %625 = vmatprep.subr.mxu0 0.0
        %626 = vmatpush1.msra.mxu0 0.0
        %627 = vmatprep.subr.mxu0 0.0
        %628 = vmatpush1.msra.mxu0 0.0
        %629 = vmatprep.subr.mxu0 0.0
        %630 = vmatpush1.msra.mxu0 0.0
        %631 = vmatprep.mubr.f32.mxu0 0.0
        %632 = vmatmul.mubr.f32.gmra.mrb[0].mxu0 %v559
        %v633 = vpop.f32.mrb[0].mxu0
        %v634 = vadd.f32 0.0, %v633
        %v635 = vpop.f32.mrb[0].mxu0
        %v636 = vadd.f32 0.0, %v635
        %637 = vdwg.mxu0
        %v638 = vadd.f32 %v530, %v634
        %v639 = vadd.f32 %v532, %v636
        %v640 = vld [vmem:[#allocation2] sm:$0xff]
        %v641 = vld [vmem:[#allocation2 + $0x8] sm:$0xf]
        %v644 = vcombine.high %v640, %v640
        %645 = vrot.lane.b32.xlu0 %v640, 1
        %v646 = vpop.permute.xlu0 %645
        %647 = vrot.lane.b32.xlu0 %v644, 1
        %v648 = vpop.permute.xlu0 %647
        %649 = vrot.lane.b32.xlu0 %v641, 1
        %v650 = vpop.permute.xlu0 %649
        %vm651 = vcmask 7168
        %v652 = vsel %vm651, %v646, %v648
        %v653 = vsel %vm651, %v648, %v650
        %v656 = vsel %vm344, %v652, 0.0
        %v657 = vsel %vm345, %v653, 0.0
        %s658 = scalar_lea.vmem %s1, 24
        %v659 = vld [vmem:[%s658] sm:$0xff]
        %v661 = vsel %vm374, %v659, 0
        %v664 = vsel %vm378, %v656, 0
        %v667 = vsel %vm378, %v657, 0
        %669 = vmatprep.subr.mxu0 %v667
        %670 = vmatpush1.msra.mxu0 %v664
        %671 = vmatprep.subr.mxu0 0.0
        %672 = vmatpush1.msra.mxu0 0.0
        %673 = vmatprep.subr.mxu0 0.0
        %674 = vmatpush1.msra.mxu0 0.0
        %675 = vmatprep.subr.mxu0 0.0
        %676 = vmatpush1.msra.mxu0 0.0
        %677 = vmatprep.subr.mxu0 0.0
        %678 = vmatpush1.msra.mxu0 0.0
        %679 = vmatprep.subr.mxu0 0.0
        %680 = vmatpush1.msra.mxu0 0.0
        %681 = vmatprep.subr.mxu0 0.0
        %682 = vmatpush1.msra.mxu0 0.0
        %683 = vmatprep.subr.mxu0 0.0
        %684 = vmatpush1.msra.mxu0 0.0
        %685 = vmatprep.subr.mxu0 0.0
        %686 = vmatpush1.msra.mxu0 0.0
        %687 = vmatprep.subr.mxu0 0.0
        %688 = vmatpush1.msra.mxu0 0.0
        %689 = vmatprep.subr.mxu0 0.0
        %690 = vmatpush1.msra.mxu0 0.0
        %691 = vmatprep.subr.mxu0 0.0
        %692 = vmatpush1.msra.mxu0 0.0
        %693 = vmatprep.subr.mxu0 0.0
        %694 = vmatpush1.msra.mxu0 0.0
        %695 = vmatprep.subr.mxu0 0.0
        %696 = vmatpush1.msra.mxu0 0.0
        %697 = vmatprep.subr.mxu0 0.0
        %698 = vmatpush1.msra.mxu0 0.0
        %699 = vmatprep.subr.mxu0 0.0
        %700 = vmatpush1.msra.mxu0 0.0
        %701 = vmatprep.subr.mxu0 0.0
        %702 = vmatpush1.msra.mxu0 0.0
        %703 = vmatprep.subr.mxu0 0.0
        %704 = vmatpush1.msra.mxu0 0.0
        %705 = vmatprep.subr.mxu0 0.0
        %706 = vmatpush1.msra.mxu0 0.0
        %707 = vmatprep.subr.mxu0 0.0
        %708 = vmatpush1.msra.mxu0 0.0
        %709 = vmatprep.subr.mxu0 0.0
        %710 = vmatpush1.msra.mxu0 0.0
        %711 = vmatprep.subr.mxu0 0.0
        %712 = vmatpush1.msra.mxu0 0.0
        %713 = vmatprep.subr.mxu0 0.0
        %714 = vmatpush1.msra.mxu0 0.0
        %715 = vmatprep.subr.mxu0 0.0
        %716 = vmatpush1.msra.mxu0 0.0
        %717 = vmatprep.subr.mxu0 0.0
        %718 = vmatpush1.msra.mxu0 0.0
        %719 = vmatprep.subr.mxu0 0.0
        %720 = vmatpush1.msra.mxu0 0.0
        %721 = vmatprep.subr.mxu0 0.0
        %722 = vmatpush1.msra.mxu0 0.0
        %723 = vmatprep.subr.mxu0 0.0
        %724 = vmatpush1.msra.mxu0 0.0
        %725 = vmatprep.subr.mxu0 0.0
        %726 = vmatpush1.msra.mxu0 0.0
        %727 = vmatprep.subr.mxu0 0.0
        %728 = vmatpush1.msra.mxu0 0.0
        %729 = vmatprep.subr.mxu0 0.0
        %730 = vmatpush1.msra.mxu0 0.0
        %731 = vmatprep.subr.mxu0 0.0
        %732 = vmatpush1.msra.mxu0 0.0
        %733 = vmatprep.mubr.f32.mxu0 0.0
        %734 = vmatmul.mubr.f32.gmra.mrb[0].mxu0 %v661
        %v735 = vpop.f32.mrb[0].mxu0
        %v736 = vadd.f32 0.0, %v735
        %v737 = vpop.f32.mrb[0].mxu0
        %v738 = vadd.f32 0.0, %v737
        %739 = vdwg.mxu0
        %v740 = vadd.f32 %v638, %v736
        %v741 = vadd.f32 %v639, %v738
        %v742 = vld [vmem:[#allocation2 + $0x4] sm:$0xff]
        %s743 = scalar_lea.vmem %s1, 32
        %v744 = vld [vmem:[%s743] sm:$0xff]
        %v746 = vcombine.high %v742, %v742
        %v748 = vsel %vm374, %v744, 0
        %v750 = vsel %vm378, %v742, 0
        %v752 = vsel %vm378, %v746, 0
        %754 = vmatprep.subr.mxu0 %v752
        %755 = vmatpush1.msra.mxu0 %v750
        %756 = vmatprep.subr.mxu0 0.0
        %757 = vmatpush1.msra.mxu0 0.0
        %758 = vmatprep.subr.mxu0 0.0
        %759 = vmatpush1.msra.mxu0 0.0
        %760 = vmatprep.subr.mxu0 0.0
        %761 = vmatpush1.msra.mxu0 0.0
        %762 = vmatprep.subr.mxu0 0.0
        %763 = vmatpush1.msra.mxu0 0.0
        %764 = vmatprep.subr.mxu0 0.0
        %765 = vmatpush1.msra.mxu0 0.0
        %766 = vmatprep.subr.mxu0 0.0
        %767 = vmatpush1.msra.mxu0 0.0
        %768 = vmatprep.subr.mxu0 0.0
        %769 = vmatpush1.msra.mxu0 0.0
        %770 = vmatprep.subr.mxu0 0.0
        %771 = vmatpush1.msra.mxu0 0.0
        %772 = vmatprep.subr.mxu0 0.0
        %773 = vmatpush1.msra.mxu0 0.0
        %774 = vmatprep.subr.mxu0 0.0
        %775 = vmatpush1.msra.mxu0 0.0
        %776 = vmatprep.subr.mxu0 0.0
        %777 = vmatpush1.msra.mxu0 0.0
        %778 = vmatprep.subr.mxu0 0.0
        %779 = vmatpush1.msra.mxu0 0.0
        %780 = vmatprep.subr.mxu0 0.0
        %781 = vmatpush1.msra.mxu0 0.0
        %782 = vmatprep.subr.mxu0 0.0
        %783 = vmatpush1.msra.mxu0 0.0
        %784 = vmatprep.subr.mxu0 0.0
        %785 = vmatpush1.msra.mxu0 0.0
        %786 = vmatprep.subr.mxu0 0.0
        %787 = vmatpush1.msra.mxu0 0.0
        %788 = vmatprep.subr.mxu0 0.0
        %789 = vmatpush1.msra.mxu0 0.0
        %790 = vmatprep.subr.mxu0 0.0
        %791 = vmatpush1.msra.mxu0 0.0
        %792 = vmatprep.subr.mxu0 0.0
        %793 = vmatpush1.msra.mxu0 0.0
        %794 = vmatprep.subr.mxu0 0.0
        %795 = vmatpush1.msra.mxu0 0.0
        %796 = vmatprep.subr.mxu0 0.0
        %797 = vmatpush1.msra.mxu0 0.0
        %798 = vmatprep.subr.mxu0 0.0
        %799 = vmatpush1.msra.mxu0 0.0
        %800 = vmatprep.subr.mxu0 0.0
        %801 = vmatpush1.msra.mxu0 0.0
        %802 = vmatprep.subr.mxu0 0.0
        %803 = vmatpush1.msra.mxu0 0.0
        %804 = vmatprep.subr.mxu0 0.0
        %805 = vmatpush1.msra.mxu0 0.0
        %806 = vmatprep.subr.mxu0 0.0
        %807 = vmatpush1.msra.mxu0 0.0
        %808 = vmatprep.subr.mxu0 0.0
        %809 = vmatpush1.msra.mxu0 0.0
        %810 = vmatprep.subr.mxu0 0.0
        %811 = vmatpush1.msra.mxu0 0.0
        %812 = vmatprep.subr.mxu0 0.0
        %813 = vmatpush1.msra.mxu0 0.0
        %814 = vmatprep.subr.mxu0 0.0
        %815 = vmatpush1.msra.mxu0 0.0
        %816 = vmatprep.subr.mxu0 0.0
        %817 = vmatpush1.msra.mxu0 0.0
        %818 = vmatprep.mubr.f32.mxu0 0.0
        %819 = vmatmul.mubr.f32.gmra.mrb[0].mxu0 %v748
        %v820 = vpop.f32.mrb[0].mxu0
        %v821 = vadd.f32 0.0, %v820
        %v822 = vpop.f32.mrb[0].mxu0
        %v823 = vadd.f32 0.0, %v822
        %824 = vdwg.mxu0
        %v825 = vadd.f32 %v740, %v821
        %v826 = vadd.f32 %v741, %v823
        %v827 = vld [vmem:[#allocation2 + $0x4] sm:$0xff]
        %v828 = vld [vmem:[#allocation2 + $0xc] sm:$0xf]
        %v831 = vcombine.high %v827, %v827
        %832 = vrot.lane.b32.xlu0 %v827, 127
        %v833 = vpop.permute.xlu0 %832
        %834 = vrot.lane.b32.xlu0 %v831, 127
        %v835 = vpop.permute.xlu0 %834
        %836 = vrot.lane.b32.xlu0 %v828, 127
        %v837 = vpop.permute.xlu0 %836
        %vm838 = vcmask 1039360
        %v839 = vsel %vm838, %v833, %v835
        %v840 = vsel %vm838, %v835, %v837
        %v843 = vsel %vm538, %v839, 0.0
        %v844 = vsel %vm539, %v840, 0.0
        %s845 = scalar_lea.vmem %s1, 40
        %v846 = vld [vmem:[%s845] sm:$0xff]
        %v848 = vsel %vm374, %v846, 0
        %v851 = vsel %vm378, %v843, 0
        %v854 = vsel %vm378, %v844, 0
        %856 = vmatprep.subr.mxu0 %v854
        %857 = vmatpush1.msra.mxu0 %v851
        %858 = vmatprep.subr.mxu0 0.0
        %859 = vmatpush1.msra.mxu0 0.0
        %860 = vmatprep.subr.mxu0 0.0
        %861 = vmatpush1.msra.mxu0 0.0
        %862 = vmatprep.subr.mxu0 0.0
        %863 = vmatpush1.msra.mxu0 0.0
        %864 = vmatprep.subr.mxu0 0.0
        %865 = vmatpush1.msra.mxu0 0.0
        %866 = vmatprep.subr.mxu0 0.0
        %867 = vmatpush1.msra.mxu0 0.0
        %868 = vmatprep.subr.mxu0 0.0
        %869 = vmatpush1.msra.mxu0 0.0
        %870 = vmatprep.subr.mxu0 0.0
        %871 = vmatpush1.msra.mxu0 0.0
        %872 = vmatprep.subr.mxu0 0.0
        %873 = vmatpush1.msra.mxu0 0.0
        %874 = vmatprep.subr.mxu0 0.0
        %875 = vmatpush1.msra.mxu0 0.0
        %876 = vmatprep.subr.mxu0 0.0
        %877 = vmatpush1.msra.mxu0 0.0
        %878 = vmatprep.subr.mxu0 0.0
        %879 = vmatpush1.msra.mxu0 0.0
        %880 = vmatprep.subr.mxu0 0.0
        %881 = vmatpush1.msra.mxu0 0.0
        %882 = vmatprep.subr.mxu0 0.0
        %883 = vmatpush1.msra.mxu0 0.0
        %884 = vmatprep.subr.mxu0 0.0
        %885 = vmatpush1.msra.mxu0 0.0
        %886 = vmatprep.subr.mxu0 0.0
        %887 = vmatpush1.msra.mxu0 0.0
        %888 = vmatprep.subr.mxu0 0.0
        %889 = vmatpush1.msra.mxu0 0.0
        %890 = vmatprep.subr.mxu0 0.0
        %891 = vmatpush1.msra.mxu0 0.0
        %892 = vmatprep.subr.mxu0 0.0
        %893 = vmatpush1.msra.mxu0 0.0
        %894 = vmatprep.subr.mxu0 0.0
        %895 = vmatpush1.msra.mxu0 0.0
        %896 = vmatprep.subr.mxu0 0.0
        %897 = vmatpush1.msra.mxu0 0.0
        %898 = vmatprep.subr.mxu0 0.0
        %899 = vmatpush1.msra.mxu0 0.0
        %900 = vmatprep.subr.mxu0 0.0
        %901 = vmatpush1.msra.mxu0 0.0
        %902 = vmatprep.subr.mxu0 0.0
        %903 = vmatpush1.msra.mxu0 0.0
        %904 = vmatprep.subr.mxu0 0.0
        %905 = vmatpush1.msra.mxu0 0.0
        %906 = vmatprep.subr.mxu0 0.0
        %907 = vmatpush1.msra.mxu0 0.0
        %908 = vmatprep.subr.mxu0 0.0
        %909 = vmatpush1.msra.mxu0 0.0
        %910 = vmatprep.subr.mxu0 0.0
        %911 = vmatpush1.msra.mxu0 0.0
        %912 = vmatprep.subr.mxu0 0.0
        %913 = vmatpush1.msra.mxu0 0.0
        %914 = vmatprep.subr.mxu0 0.0
        %915 = vmatpush1.msra.mxu0 0.0
        %916 = vmatprep.subr.mxu0 0.0
        %917 = vmatpush1.msra.mxu0 0.0
        %918 = vmatprep.subr.mxu0 0.0
        %919 = vmatpush1.msra.mxu0 0.0
        %920 = vmatprep.mubr.f32.mxu0 0.0
        %921 = vmatmul.mubr.f32.gmra.mrb[0].mxu0 %v848
        %v922 = vpop.f32.mrb[0].mxu0
        %v923 = vadd.f32 0.0, %v922
        %v924 = vpop.f32.mrb[0].mxu0
        %v925 = vadd.f32 0.0, %v924
        %926 = vdwg.mxu0
        %v927 = vadd.f32 %v825, %v923
        %v928 = vadd.f32 %v826, %v925
        %v929 = vld [vmem:[#allocation2 + $0x4] sm:$0xff]
        %v930 = vld [vmem:[#allocation2 + $0xc] sm:$0xf]
        %v933 = vcombine.high %v929, %v929
        %934 = vrot.lane.b32.xlu0 %v929, 113
        %v935 = vpop.permute.xlu0 %934
        %936 = vrot.lane.b32.xlu0 %v933, 113
        %v937 = vpop.permute.xlu0 %936
        %938 = vrot.lane.b32.xlu0 %v930, 113
        %v939 = vpop.permute.xlu0 %938
        %vm940 = vcmask 924672
        %v941 = vsel %vm940, %v935, %v937
        %v942 = vsel %vm940, %v937, %v939
        %v945 = vsel %vm344, %v941, 0.0
        %v946 = vsel %vm345, %v942, 0.0
        %s947 = scalar_lea.vmem %s1, 48
        %v948 = vld [vmem:[%s947] sm:$0xff]
        %v950 = vsel %vm374, %v948, 0
        %v953 = vsel %vm378, %v945, 0
        %v956 = vsel %vm378, %v946, 0
        %958 = vmatprep.subr.mxu0 %v956
        %959 = vmatpush1.msra.mxu0 %v953
        %960 = vmatprep.subr.mxu0 0.0
        %961 = vmatpush1.msra.mxu0 0.0
        %962 = vmatprep.subr.mxu0 0.0
        %963 = vmatpush1.msra.mxu0 0.0
        %964 = vmatprep.subr.mxu0 0.0
        %965 = vmatpush1.msra.mxu0 0.0
        %966 = vmatprep.subr.mxu0 0.0
        %967 = vmatpush1.msra.mxu0 0.0
        %968 = vmatprep.subr.mxu0 0.0
        %969 = vmatpush1.msra.mxu0 0.0
        %970 = vmatprep.subr.mxu0 0.0
        %971 = vmatpush1.msra.mxu0 0.0
        %972 = vmatprep.subr.mxu0 0.0
        %973 = vmatpush1.msra.mxu0 0.0
        %974 = vmatprep.subr.mxu0 0.0
        %975 = vmatpush1.msra.mxu0 0.0
        %976 = vmatprep.subr.mxu0 0.0
        %977 = vmatpush1.msra.mxu0 0.0
        %978 = vmatprep.subr.mxu0 0.0
        %979 = vmatpush1.msra.mxu0 0.0
        %980 = vmatprep.subr.mxu0 0.0
        %981 = vmatpush1.msra.mxu0 0.0
        %982 = vmatprep.subr.mxu0 0.0
        %983 = vmatpush1.msra.mxu0 0.0
        %984 = vmatprep.subr.mxu0 0.0
        %985 = vmatpush1.msra.mxu0 0.0
        %986 = vmatprep.subr.mxu0 0.0
        %987 = vmatpush1.msra.mxu0 0.0
        %988 = vmatprep.subr.mxu0 0.0
        %989 = vmatpush1.msra.mxu0 0.0
        %990 = vmatprep.subr.mxu0 0.0
        %991 = vmatpush1.msra.mxu0 0.0
        %992 = vmatprep.subr.mxu0 0.0
        %993 = vmatpush1.msra.mxu0 0.0
        %994 = vmatprep.subr.mxu0 0.0
        %995 = vmatpush1.msra.mxu0 0.0
        %996 = vmatprep.subr.mxu0 0.0
        %997 = vmatpush1.msra.mxu0 0.0
        %998 = vmatprep.subr.mxu0 0.0
        %999 = vmatpush1.msra.mxu0 0.0
        %1000 = vmatprep.subr.mxu0 0.0
        %1001 = vmatpush1.msra.mxu0 0.0
        %1002 = vmatprep.subr.mxu0 0.0
        %1003 = vmatpush1.msra.mxu0 0.0
        %1004 = vmatprep.subr.mxu0 0.0
        %1005 = vmatpush1.msra.mxu0 0.0
        %1006 = vmatprep.subr.mxu0 0.0
        %1007 = vmatpush1.msra.mxu0 0.0
        %1008 = vmatprep.subr.mxu0 0.0
        %1009 = vmatpush1.msra.mxu0 0.0
        %1010 = vmatprep.subr.mxu0 0.0
        %1011 = vmatpush1.msra.mxu0 0.0
        %1012 = vmatprep.subr.mxu0 0.0
        %1013 = vmatpush1.msra.mxu0 0.0
        %1014 = vmatprep.subr.mxu0 0.0
        %1015 = vmatpush1.msra.mxu0 0.0
        %1016 = vmatprep.subr.mxu0 0.0
        %1017 = vmatpush1.msra.mxu0 0.0
        %1018 = vmatprep.subr.mxu0 0.0
        %1019 = vmatpush1.msra.mxu0 0.0
        %1020 = vmatprep.subr.mxu0 0.0
        %1021 = vmatpush1.msra.mxu0 0.0
        %1022 = vmatprep.mubr.f32.mxu0 0.0
        %1023 = vmatmul.mubr.f32.gmra.mrb[0].mxu0 %v950
        %v1024 = vpop.f32.mrb[0].mxu0
        %v1025 = vadd.f32 0.0, %v1024
        %v1026 = vpop.f32.mrb[0].mxu0
        %v1027 = vadd.f32 0.0, %v1026
        %1028 = vdwg.mxu0
        %v1029 = vadd.f32 %v927, %v1025
        %v1030 = vadd.f32 %v928, %v1027
        %v1031 = vld [vmem:[#allocation2 + $0x4] sm:$0xff]
        %v1032 = vld [vmem:[#allocation2 + $0xc] sm:$0xf]
        %s1033 = scalar_lea.vmem %s1, 56
        %v1034 = vld [vmem:[%s1033] sm:$0xff]
        %v1037 = vcombine.high %v1031, %v1031
        %1038 = vrot.lane.b32.xlu0 %v1031, 112
        %v1039 = vpop.permute.xlu0 %1038
        %1040 = vrot.lane.b32.xlu0 %v1037, 112
        %v1041 = vpop.permute.xlu0 %1040
        %1042 = vrot.lane.b32.xlu0 %v1032, 112
        %v1043 = vpop.permute.xlu0 %1042
        %vm1044 = vcmask 916480
        %v1045 = vsel %vm1044, %v1039, %v1041
        %v1046 = vsel %vm1044, %v1041, %v1043
        %v1048 = vsel %vm374, %v1034, 0
        %v1050 = vsel %vm378, %v1045, 0
        %v1052 = vsel %vm378, %v1046, 0
        %1054 = vmatprep.subr.mxu0 %v1052
        %1055 = vmatpush1.msra.mxu0 %v1050
        %1056 = vmatprep.subr.mxu0 0.0
        %1057 = vmatpush1.msra.mxu0 0.0
        %1058 = vmatprep.subr.mxu0 0.0
        %1059 = vmatpush1.msra.mxu0 0.0
        %1060 = vmatprep.subr.mxu0 0.0
        %1061 = vmatpush1.msra.mxu0 0.0
        %1062 = vmatprep.subr.mxu0 0.0
        %1063 = vmatpush1.msra.mxu0 0.0
        %1064 = vmatprep.subr.mxu0 0.0
        %1065 = vmatpush1.msra.mxu0 0.0
        %1066 = vmatprep.subr.mxu0 0.0
        %1067 = vmatpush1.msra.mxu0 0.0
        %1068 = vmatprep.subr.mxu0 0.0
        %1069 = vmatpush1.msra.mxu0 0.0
        %1070 = vmatprep.subr.mxu0 0.0
        %1071 = vmatpush1.msra.mxu0 0.0
        %1072 = vmatprep.subr.mxu0 0.0
        %1073 = vmatpush1.msra.mxu0 0.0
        %1074 = vmatprep.subr.mxu0 0.0
        %1075 = vmatpush1.msra.mxu0 0.0
        %1076 = vmatprep.subr.mxu0 0.0
        %1077 = vmatpush1.msra.mxu0 0.0
        %1078 = vmatprep.subr.mxu0 0.0
        %1079 = vmatpush1.msra.mxu0 0.0
        %1080 = vmatprep.subr.mxu0 0.0
        %1081 = vmatpush1.msra.mxu0 0.0
        %1082 = vmatprep.subr.mxu0 0.0
        %1083 = vmatpush1.msra.mxu0 0.0
        %1084 = vmatprep.subr.mxu0 0.0
        %1085 = vmatpush1.msra.mxu0 0.0
        %1086 = vmatprep.subr.mxu0 0.0
        %1087 = vmatpush1.msra.mxu0 0.0
        %1088 = vmatprep.subr.mxu0 0.0
        %1089 = vmatpush1.msra.mxu0 0.0
        %1090 = vmatprep.subr.mxu0 0.0
        %1091 = vmatpush1.msra.mxu0 0.0
        %1092 = vmatprep.subr.mxu0 0.0
        %1093 = vmatpush1.msra.mxu0 0.0
        %1094 = vmatprep.subr.mxu0 0.0
        %1095 = vmatpush1.msra.mxu0 0.0
        %1096 = vmatprep.subr.mxu0 0.0
        %1097 = vmatpush1.msra.mxu0 0.0
        %1098 = vmatprep.subr.mxu0 0.0
        %1099 = vmatpush1.msra.mxu0 0.0
        %1100 = vmatprep.subr.mxu0 0.0
        %1101 = vmatpush1.msra.mxu0 0.0
        %1102 = vmatprep.subr.mxu0 0.0
        %1103 = vmatpush1.msra.mxu0 0.0
        %1104 = vmatprep.subr.mxu0 0.0
        %1105 = vmatpush1.msra.mxu0 0.0
        %1106 = vmatprep.subr.mxu0 0.0
        %1107 = vmatpush1.msra.mxu0 0.0
        %1108 = vmatprep.subr.mxu0 0.0
        %1109 = vmatpush1.msra.mxu0 0.0
        %1110 = vmatprep.subr.mxu0 0.0
        %1111 = vmatpush1.msra.mxu0 0.0
        %1112 = vmatprep.subr.mxu0 0.0
        %1113 = vmatpush1.msra.mxu0 0.0
        %1114 = vmatprep.subr.mxu0 0.0
        %1115 = vmatpush1.msra.mxu0 0.0
        %1116 = vmatprep.subr.mxu0 0.0
        %1117 = vmatpush1.msra.mxu0 0.0
        %1118 = vmatprep.mubr.f32.mxu0 0.0
        %1119 = vmatmul.mubr.f32.gmra.mrb[0].mxu0 %v1048
        %v1120 = vpop.f32.mrb[0].mxu0
        %v1121 = vadd.f32 0.0, %v1120
        %v1122 = vpop.f32.mrb[0].mxu0
        %v1123 = vadd.f32 0.0, %v1122
        %1124 = vdwg.mxu0
        %v1125 = vadd.f32 %v1029, %v1121
        %v1126 = vadd.f32 %v1030, %v1123
        %v1127 = vld [vmem:[#allocation2 + $0x4] sm:$0xff]
        %v1128 = vld [vmem:[#allocation2 + $0xc] sm:$0xf]
        %v1131 = vcombine.high %v1127, %v1127
        %1132 = vrot.lane.b32.xlu0 %v1127, 111
        %v1133 = vpop.permute.xlu0 %1132
        %1134 = vrot.lane.b32.xlu0 %v1131, 111
        %v1135 = vpop.permute.xlu0 %1134
        %1136 = vrot.lane.b32.xlu0 %v1128, 111
        %v1137 = vpop.permute.xlu0 %1136
        %vm1138 = vcmask 908288
        %v1139 = vsel %vm1138, %v1133, %v1135
        %v1140 = vsel %vm1138, %v1135, %v1137
        %v1143 = vsel %vm538, %v1139, 0.0
        %v1144 = vsel %vm539, %v1140, 0.0
        %s1145 = scalar_lea.vmem %s1, 64
        %v1146 = vld [vmem:[%s1145] sm:$0xff]
        %v1148 = vsel %vm374, %v1146, 0
        %v1151 = vsel %vm378, %v1143, 0
        %v1154 = vsel %vm378, %v1144, 0
        %1156 = vmatprep.subr.mxu0 %v1154
        %1157 = vmatpush1.msra.mxu0 %v1151
        %1158 = vmatprep.subr.mxu0 0.0
        %1159 = vmatpush1.msra.mxu0 0.0
        %1160 = vmatprep.subr.mxu0 0.0
        %1161 = vmatpush1.msra.mxu0 0.0
        %1162 = vmatprep.subr.mxu0 0.0
        %1163 = vmatpush1.msra.mxu0 0.0
        %1164 = vmatprep.subr.mxu0 0.0
        %1165 = vmatpush1.msra.mxu0 0.0
        %1166 = vmatprep.subr.mxu0 0.0
        %1167 = vmatpush1.msra.mxu0 0.0
        %1168 = vmatprep.subr.mxu0 0.0
        %1169 = vmatpush1.msra.mxu0 0.0
        %1170 = vmatprep.subr.mxu0 0.0
        %1171 = vmatpush1.msra.mxu0 0.0
        %1172 = vmatprep.subr.mxu0 0.0
        %1173 = vmatpush1.msra.mxu0 0.0
        %1174 = vmatprep.subr.mxu0 0.0
        %1175 = vmatpush1.msra.mxu0 0.0
        %1176 = vmatprep.subr.mxu0 0.0
        %1177 = vmatpush1.msra.mxu0 0.0
        %1178 = vmatprep.subr.mxu0 0.0
        %1179 = vmatpush1.msra.mxu0 0.0
        %1180 = vmatprep.subr.mxu0 0.0
        %1181 = vmatpush1.msra.mxu0 0.0
        %1182 = vmatprep.subr.mxu0 0.0
        %1183 = vmatpush1.msra.mxu0 0.0
        %1184 = vmatprep.subr.mxu0 0.0
        %1185 = vmatpush1.msra.mxu0 0.0
        %1186 = vmatprep.subr.mxu0 0.0
        %1187 = vmatpush1.msra.mxu0 0.0
        %1188 = vmatprep.subr.mxu0 0.0
        %1189 = vmatpush1.msra.mxu0 0.0
        %1190 = vmatprep.subr.mxu0 0.0
        %1191 = vmatpush1.msra.mxu0 0.0
        %1192 = vmatprep.subr.mxu0 0.0
        %1193 = vmatpush1.msra.mxu0 0.0
        %1194 = vmatprep.subr.mxu0 0.0
        %1195 = vmatpush1.msra.mxu0 0.0
        %1196 = vmatprep.subr.mxu0 0.0
        %1197 = vmatpush1.msra.mxu0 0.0
        %1198 = vmatprep.subr.mxu0 0.0
        %1199 = vmatpush1.msra.mxu0 0.0
        %1200 = vmatprep.subr.mxu0 0.0
        %1201 = vmatpush1.msra.mxu0 0.0
        %1202 = vmatprep.subr.mxu0 0.0
        %1203 = vmatpush1.msra.mxu0 0.0
        %1204 = vmatprep.subr.mxu0 0.0
        %1205 = vmatpush1.msra.mxu0 0.0
        %1206 = vmatprep.subr.mxu0 0.0
        %1207 = vmatpush1.msra.mxu0 0.0
        %1208 = vmatprep.subr.mxu0 0.0
        %1209 = vmatpush1.msra.mxu0 0.0
        %1210 = vmatprep.subr.mxu0 0.0
        %1211 = vmatpush1.msra.mxu0 0.0
        %1212 = vmatprep.subr.mxu0 0.0
        %1213 = vmatpush1.msra.mxu0 0.0
        %1214 = vmatprep.subr.mxu0 0.0
        %1215 = vmatpush1.msra.mxu0 0.0
        %1216 = vmatprep.subr.mxu0 0.0
        %1217 = vmatpush1.msra.mxu0 0.0
        %1218 = vmatprep.subr.mxu0 0.0
        %1219 = vmatpush1.msra.mxu0 0.0
        %1220 = vmatprep.mubr.f32.mxu0 0.0
        %1221 = vmatmul.mubr.f32.gmra.mrb[0].mxu0 %v1148
        %v1222 = vpop.f32.mrb[0].mxu0
        %v1223 = vadd.f32 0.0, %v1222
        %v1224 = vpop.f32.mrb[0].mxu0
        %v1225 = vadd.f32 0.0, %v1224
        %1226 = vdwg.mxu0
        %v1227 = vadd.f32 %v1125, %v1223
        %v1228 = vadd.f32 %v1126, %v1225
        %v1229 = vld [vmem:[%s5] sm:$0xff]
        %1231 = vset.pattern.permute.xlu0 0
        %1232 = vperm.xlu0 %1231, %v1229
        %v1233 = vpop.permute.xlu0 %1232
        %v1235 = vadd.f32 %v1227, %v1233
        %v1236 = vadd.f32 %v1228, %v1233
        %v1237 = vmul.f32 %v1235, 0.01
        %v1238 = vmul.f32 %v1236, 0.01
        %v1239 = vmax.f32 %v1235, %v1237
        %v1240 = vmax.f32 %v1236, %v1238
        %1241 = vst [vmem:[#allocation3] sm:$0xff] 0.0
        %1242 = vst [vmem:[#allocation3 + $0x18] sm:$0xff] 0.0
        %1243 = vst [vmem:[#allocation3 + $0x8] sm:$0xff] %v1239
        %1244 = vst [vmem:[#allocation3 + $0x10] sm:$0xff] %v1240
        %v1245 = vld [vmem:[#allocation3] sm:$0xff]
        %v1246 = vld [vmem:[#allocation3 + $0x8] sm:$0xff]
        %v1247 = vld [vmem:[#allocation3 + $0x10] sm:$0xff]
        %1251 = vrot.lane.b32.xlu0 %v1245, 17
        %v1252 = vpop.permute.xlu0 %1251
        %1253 = vrot.lane.b32.xlu0 %v1246, 17
        %v1254 = vpop.permute.xlu0 %1253
        %1255 = vrot.lane.b32.xlu0 %v1247, 17
        %v1256 = vpop.permute.xlu0 %1255
        %v1257 = vsel %vm355, %v1252, %v1254
        %v1258 = vsel %vm355, %v1254, %v1256
        %v1261 = vsel %vm344, %v1257, 0.0
        %v1262 = vsel %vm345, %v1258, 0.0
        %v1263 = vld [vmem:[%s2] sm:$0xff]
        %s1264 = scalar_lea.vmem %s2, 8
        %v1265 = vld [vmem:[%s1264] sm:$0xff]
        %1266 = vrot.lane.b32.xlu0 %v1245, 16
        %v1267 = vpop.permute.xlu0 %1266
        %1268 = vrot.lane.b32.xlu0 %v1246, 16
        %v1269 = vpop.permute.xlu0 %1268
        %1270 = vrot.lane.b32.xlu0 %v1247, 16
        %v1271 = vpop.permute.xlu0 %1270
        %v1272 = vsel %vm371, %v1267, %v1269
        %v1273 = vsel %vm371, %v1269, %v1271
        %vm1276 = vcmask 64512
        %v1278 = vsel %vm1276, %v1265, 0
        %1280 = vmatprep.subr.mxu0 %v1273
        %1281 = vmatpush1.msra.mxu0 %v1272
        %1282 = vmatprep.subr.mxu0 0.0
        %1283 = vmatpush1.msra.mxu0 0.0
        %1284 = vmatprep.subr.mxu0 0.0
        %1285 = vmatpush1.msra.mxu0 0.0
        %1286 = vmatprep.subr.mxu0 0.0
        %1287 = vmatpush1.msra.mxu0 0.0
        %1288 = vmatprep.subr.mxu0 0.0
        %1289 = vmatpush1.msra.mxu0 0.0
        %1290 = vmatprep.subr.mxu0 0.0
        %1291 = vmatpush1.msra.mxu0 0.0
        %1292 = vmatprep.subr.mxu0 0.0
        %1293 = vmatpush1.msra.mxu0 0.0
        %1294 = vmatprep.subr.mxu0 0.0
        %1295 = vmatpush1.msra.mxu0 0.0
        %1296 = vmatprep.subr.mxu0 0.0
        %1297 = vmatpush1.msra.mxu0 0.0
        %1298 = vmatprep.subr.mxu0 0.0
        %1299 = vmatpush1.msra.mxu0 0.0
        %1300 = vmatprep.subr.mxu0 0.0
        %1301 = vmatpush1.msra.mxu0 0.0
        %1302 = vmatprep.subr.mxu0 0.0
        %1303 = vmatpush1.msra.mxu0 0.0
        %1304 = vmatprep.subr.mxu0 0.0
        %1305 = vmatpush1.msra.mxu0 0.0
        %1306 = vmatprep.subr.mxu0 0.0
        %1307 = vmatpush1.msra.mxu0 0.0
        %1308 = vmatprep.subr.mxu0 0.0
        %1309 = vmatpush1.msra.mxu0 0.0
        %1310 = vmatprep.subr.mxu0 0.0
        %1311 = vmatpush1.msra.mxu0 0.0
        %1312 = vmatprep.subr.mxu0 0.0
        %1313 = vmatpush1.msra.mxu0 0.0
        %1314 = vmatprep.subr.mxu0 0.0
        %1315 = vmatpush1.msra.mxu0 0.0
        %1316 = vmatprep.subr.mxu0 0.0
        %1317 = vmatpush1.msra.mxu0 0.0
        %1318 = vmatprep.subr.mxu0 0.0
        %1319 = vmatpush1.msra.mxu0 0.0
        %1320 = vmatprep.subr.mxu0 0.0
        %1321 = vmatpush1.msra.mxu0 0.0
        %1322 = vmatprep.subr.mxu0 0.0
        %1323 = vmatpush1.msra.mxu0 0.0
        %1324 = vmatprep.subr.mxu0 0.0
        %1325 = vmatpush1.msra.mxu0 0.0
        %1326 = vmatprep.subr.mxu0 0.0
        %1327 = vmatpush1.msra.mxu0 0.0
        %1328 = vmatprep.subr.mxu0 0.0
        %1329 = vmatpush1.msra.mxu0 0.0
        %1330 = vmatprep.subr.mxu0 0.0
        %1331 = vmatpush1.msra.mxu0 0.0
        %1332 = vmatprep.subr.mxu0 0.0
        %1333 = vmatpush1.msra.mxu0 0.0
        %1334 = vmatprep.subr.mxu0 0.0
        %1335 = vmatpush1.msra.mxu0 0.0
        %1336 = vmatprep.subr.mxu0 0.0
        %1337 = vmatpush1.msra.mxu0 0.0
        %1338 = vmatprep.subr.mxu0 0.0
        %1339 = vmatpush1.msra.mxu0 0.0
        %1340 = vmatprep.subr.mxu0 0.0
        %1341 = vmatpush1.msra.mxu0 0.0
        %1342 = vmatprep.subr.mxu0 0.0
        %1343 = vmatpush1.msra.mxu0 0.0
        %1344 = vmatprep.mubr.f32.mxu0 0.0
        %1345 = vmatmul.mubr.f32.gmra.mrb[0].mxu0 %v1278
        %v1346 = vpop.f32.mrb[0].mxu0
        %v1347 = vadd.f32 0.0, %v1346
        %v1348 = vpop.f32.mrb[0].mxu0
        %v1349 = vadd.f32 0.0, %v1348
        %1350 = vdwg.mxu0
        %v1352 = vsel %vm1276, %v1263, 0
        %1354 = vmatprep.subr.mxu0 %v1262
        %1355 = vmatpush1.msra.mxu0 %v1261
        %1356 = vmatprep.subr.mxu0 0.0
        %1357 = vmatpush1.msra.mxu0 0.0
        %1358 = vmatprep.subr.mxu0 0.0
        %1359 = vmatpush1.msra.mxu0 0.0
        %1360 = vmatprep.subr.mxu0 0.0
        %1361 = vmatpush1.msra.mxu0 0.0
        %1362 = vmatprep.subr.mxu0 0.0
        %1363 = vmatpush1.msra.mxu0 0.0
        %1364 = vmatprep.subr.mxu0 0.0
        %1365 = vmatpush1.msra.mxu0 0.0
        %1366 = vmatprep.subr.mxu0 0.0
        %1367 = vmatpush1.msra.mxu0 0.0
        %1368 = vmatprep.subr.mxu0 0.0
        %1369 = vmatpush1.msra.mxu0 0.0
        %1370 = vmatprep.subr.mxu0 0.0
        %1371 = vmatpush1.msra.mxu0 0.0
        %1372 = vmatprep.subr.mxu0 0.0
        %1373 = vmatpush1.msra.mxu0 0.0
        %1374 = vmatprep.subr.mxu0 0.0
        %1375 = vmatpush1.msra.mxu0 0.0
        %1376 = vmatprep.subr.mxu0 0.0
        %1377 = vmatpush1.msra.mxu0 0.0
        %1378 = vmatprep.subr.mxu0 0.0
        %1379 = vmatpush1.msra.mxu0 0.0
        %1380 = vmatprep.subr.mxu0 0.0
        %1381 = vmatpush1.msra.mxu0 0.0
        %1382 = vmatprep.subr.mxu0 0.0
        %1383 = vmatpush1.msra.mxu0 0.0
        %1384 = vmatprep.subr.mxu0 0.0
        %1385 = vmatpush1.msra.mxu0 0.0
        %1386 = vmatprep.subr.mxu0 0.0
        %1387 = vmatpush1.msra.mxu0 0.0
        %1388 = vmatprep.subr.mxu0 0.0
        %1389 = vmatpush1.msra.mxu0 0.0
        %1390 = vmatprep.subr.mxu0 0.0
        %1391 = vmatpush1.msra.mxu0 0.0
        %1392 = vmatprep.subr.mxu0 0.0
        %1393 = vmatpush1.msra.mxu0 0.0
        %1394 = vmatprep.subr.mxu0 0.0
        %1395 = vmatpush1.msra.mxu0 0.0
        %1396 = vmatprep.subr.mxu0 0.0
        %1397 = vmatpush1.msra.mxu0 0.0
        %1398 = vmatprep.subr.mxu0 0.0
        %1399 = vmatpush1.msra.mxu0 0.0
        %1400 = vmatprep.subr.mxu0 0.0
        %1401 = vmatpush1.msra.mxu0 0.0
        %1402 = vmatprep.subr.mxu0 0.0
        %1403 = vmatpush1.msra.mxu0 0.0
        %1404 = vmatprep.subr.mxu0 0.0
        %1405 = vmatpush1.msra.mxu0 0.0
        %1406 = vmatprep.subr.mxu0 0.0
        %1407 = vmatpush1.msra.mxu0 0.0
        %1408 = vmatprep.subr.mxu0 0.0
        %1409 = vmatpush1.msra.mxu0 0.0
        %1410 = vmatprep.subr.mxu0 0.0
        %1411 = vmatpush1.msra.mxu0 0.0
        %1412 = vmatprep.subr.mxu0 0.0
        %1413 = vmatpush1.msra.mxu0 0.0
        %1414 = vmatprep.subr.mxu0 0.0
        %1415 = vmatpush1.msra.mxu0 0.0
        %1416 = vmatprep.subr.mxu0 0.0
        %1417 = vmatpush1.msra.mxu0 0.0
        %1418 = vmatprep.mubr.f32.mxu0 0.0
        %1419 = vmatmul.mubr.f32.gmra.mrb[0].mxu0 %v1352
        %v1420 = vpop.f32.mrb[0].mxu0
        %v1421 = vadd.f32 %v1347, %v1420
        %v1422 = vpop.f32.mrb[0].mxu0
        %v1423 = vadd.f32 %v1349, %v1422
        %1424 = vdwg.mxu0
        %1425 = vrot.lane.b32.xlu0 %v1245, 15
        %v1426 = vpop.permute.xlu0 %1425
        %1427 = vrot.lane.b32.xlu0 %v1246, 15
        %v1428 = vpop.permute.xlu0 %1427
        %1429 = vrot.lane.b32.xlu0 %v1247, 15
        %v1430 = vpop.permute.xlu0 %1429
        %v1431 = vsel %vm549, %v1426, %v1428
        %v1432 = vsel %vm549, %v1428, %v1430
        %v1435 = vsel %vm538, %v1431, 0.0
        %v1436 = vsel %vm539, %v1432, 0.0
        %s1437 = scalar_lea.vmem %s2, 16
        %v1438 = vld [vmem:[%s1437] sm:$0xff]
        %v1440 = vsel %vm1276, %v1438, 0
        %1442 = vmatprep.subr.mxu0 %v1436
        %1443 = vmatpush1.msra.mxu0 %v1435
        %1444 = vmatprep.subr.mxu0 0.0
        %1445 = vmatpush1.msra.mxu0 0.0
        %1446 = vmatprep.subr.mxu0 0.0
        %1447 = vmatpush1.msra.mxu0 0.0
        %1448 = vmatprep.subr.mxu0 0.0
        %1449 = vmatpush1.msra.mxu0 0.0
        %1450 = vmatprep.subr.mxu0 0.0
        %1451 = vmatpush1.msra.mxu0 0.0
        %1452 = vmatprep.subr.mxu0 0.0
        %1453 = vmatpush1.msra.mxu0 0.0
        %1454 = vmatprep.subr.mxu0 0.0
        %1455 = vmatpush1.msra.mxu0 0.0
        %1456 = vmatprep.subr.mxu0 0.0
        %1457 = vmatpush1.msra.mxu0 0.0
        %1458 = vmatprep.subr.mxu0 0.0
        %1459 = vmatpush1.msra.mxu0 0.0
        %1460 = vmatprep.subr.mxu0 0.0
        %1461 = vmatpush1.msra.mxu0 0.0
        %1462 = vmatprep.subr.mxu0 0.0
        %1463 = vmatpush1.msra.mxu0 0.0
        %1464 = vmatprep.subr.mxu0 0.0
        %1465 = vmatpush1.msra.mxu0 0.0
        %1466 = vmatprep.subr.mxu0 0.0
        %1467 = vmatpush1.msra.mxu0 0.0
        %1468 = vmatprep.subr.mxu0 0.0
        %1469 = vmatpush1.msra.mxu0 0.0
        %1470 = vmatprep.subr.mxu0 0.0
        %1471 = vmatpush1.msra.mxu0 0.0
        %1472 = vmatprep.subr.mxu0 0.0
        %1473 = vmatpush1.msra.mxu0 0.0
        %1474 = vmatprep.subr.mxu0 0.0
        %1475 = vmatpush1.msra.mxu0 0.0
        %1476 = vmatprep.subr.mxu0 0.0
        %1477 = vmatpush1.msra.mxu0 0.0
        %1478 = vmatprep.subr.mxu0 0.0
        %1479 = vmatpush1.msra.mxu0 0.0
        %1480 = vmatprep.subr.mxu0 0.0
        %1481 = vmatpush1.msra.mxu0 0.0
        %1482 = vmatprep.subr.mxu0 0.0
        %1483 = vmatpush1.msra.mxu0 0.0
        %1484 = vmatprep.subr.mxu0 0.0
        %1485 = vmatpush1.msra.mxu0 0.0
        %1486 = vmatprep.subr.mxu0 0.0
        %1487 = vmatpush1.msra.mxu0 0.0
        %1488 = vmatprep.subr.mxu0 0.0
        %1489 = vmatpush1.msra.mxu0 0.0
        %1490 = vmatprep.subr.mxu0 0.0
        %1491 = vmatpush1.msra.mxu0 0.0
        %1492 = vmatprep.subr.mxu0 0.0
        %1493 = vmatpush1.msra.mxu0 0.0
        %1494 = vmatprep.subr.mxu0 0.0
        %1495 = vmatpush1.msra.mxu0 0.0
        %1496 = vmatprep.subr.mxu0 0.0
        %1497 = vmatpush1.msra.mxu0 0.0
        %1498 = vmatprep.subr.mxu0 0.0
        %1499 = vmatpush1.msra.mxu0 0.0
        %1500 = vmatprep.subr.mxu0 0.0
        %1501 = vmatpush1.msra.mxu0 0.0
        %1502 = vmatprep.subr.mxu0 0.0
        %1503 = vmatpush1.msra.mxu0 0.0
        %1504 = vmatprep.subr.mxu0 0.0
        %1505 = vmatpush1.msra.mxu0 0.0
        %1506 = vmatprep.mubr.f32.mxu0 0.0
        %1507 = vmatmul.mubr.f32.gmra.mrb[0].mxu0 %v1440
        %v1508 = vpop.f32.mrb[0].mxu0
        %v1509 = vadd.f32 0.0, %v1508
        %v1510 = vpop.f32.mrb[0].mxu0
        %v1511 = vadd.f32 0.0, %v1510
        %1512 = vdwg.mxu0
        %v1513 = vadd.f32 %v1421, %v1509
        %v1514 = vadd.f32 %v1423, %v1511
        %1515 = vrot.lane.b32.xlu0 %v1245, 1
        %v1516 = vpop.permute.xlu0 %1515
        %1517 = vrot.lane.b32.xlu0 %v1246, 1
        %v1518 = vpop.permute.xlu0 %1517
        %1519 = vrot.lane.b32.xlu0 %v1247, 1
        %v1520 = vpop.permute.xlu0 %1519
        %v1521 = vsel %vm651, %v1516, %v1518
        %v1522 = vsel %vm651, %v1518, %v1520
        %v1525 = vsel %vm344, %v1521, 0.0
        %v1526 = vsel %vm345, %v1522, 0.0
        %s1527 = scalar_lea.vmem %s2, 24
        %v1528 = vld [vmem:[%s1527] sm:$0xff]
        %v1530 = vsel %vm1276, %v1528, 0
        %1532 = vmatprep.subr.mxu0 %v1526
        %1533 = vmatpush1.msra.mxu0 %v1525
        %1534 = vmatprep.subr.mxu0 0.0
        %1535 = vmatpush1.msra.mxu0 0.0
        %1536 = vmatprep.subr.mxu0 0.0
        %1537 = vmatpush1.msra.mxu0 0.0
        %1538 = vmatprep.subr.mxu0 0.0
        %1539 = vmatpush1.msra.mxu0 0.0
        %1540 = vmatprep.subr.mxu0 0.0
        %1541 = vmatpush1.msra.mxu0 0.0
        %1542 = vmatprep.subr.mxu0 0.0
        %1543 = vmatpush1.msra.mxu0 0.0
        %1544 = vmatprep.subr.mxu0 0.0
        %1545 = vmatpush1.msra.mxu0 0.0
        %1546 = vmatprep.subr.mxu0 0.0
        %1547 = vmatpush1.msra.mxu0 0.0
        %1548 = vmatprep.subr.mxu0 0.0
        %1549 = vmatpush1.msra.mxu0 0.0
        %1550 = vmatprep.subr.mxu0 0.0
        %1551 = vmatpush1.msra.mxu0 0.0
        %1552 = vmatprep.subr.mxu0 0.0
        %1553 = vmatpush1.msra.mxu0 0.0
        %1554 = vmatprep.subr.mxu0 0.0
        %1555 = vmatpush1.msra.mxu0 0.0
        %1556 = vmatprep.subr.mxu0 0.0
        %1557 = vmatpush1.msra.mxu0 0.0
        %1558 = vmatprep.subr.mxu0 0.0
        %1559 = vmatpush1.msra.mxu0 0.0
        %1560 = vmatprep.subr.mxu0 0.0
        %1561 = vmatpush1.msra.mxu0 0.0
        %1562 = vmatprep.subr.mxu0 0.0
        %1563 = vmatpush1.msra.mxu0 0.0
        %1564 = vmatprep.subr.mxu0 0.0
        %1565 = vmatpush1.msra.mxu0 0.0
        %1566 = vmatprep.subr.mxu0 0.0
        %1567 = vmatpush1.msra.mxu0 0.0
        %1568 = vmatprep.subr.mxu0 0.0
        %1569 = vmatpush1.msra.mxu0 0.0
        %1570 = vmatprep.subr.mxu0 0.0
        %1571 = vmatpush1.msra.mxu0 0.0
        %1572 = vmatprep.subr.mxu0 0.0
        %1573 = vmatpush1.msra.mxu0 0.0
        %1574 = vmatprep.subr.mxu0 0.0
        %1575 = vmatpush1.msra.mxu0 0.0
        %1576 = vmatprep.subr.mxu0 0.0
        %1577 = vmatpush1.msra.mxu0 0.0
        %1578 = vmatprep.subr.mxu0 0.0
        %1579 = vmatpush1.msra.mxu0 0.0
        %1580 = vmatprep.subr.mxu0 0.0
        %1581 = vmatpush1.msra.mxu0 0.0
        %1582 = vmatprep.subr.mxu0 0.0
        %1583 = vmatpush1.msra.mxu0 0.0
        %1584 = vmatprep.subr.mxu0 0.0
        %1585 = vmatpush1.msra.mxu0 0.0
        %1586 = vmatprep.subr.mxu0 0.0
        %1587 = vmatpush1.msra.mxu0 0.0
        %1588 = vmatprep.subr.mxu0 0.0
        %1589 = vmatpush1.msra.mxu0 0.0
        %1590 = vmatprep.subr.mxu0 0.0
        %1591 = vmatpush1.msra.mxu0 0.0
        %1592 = vmatprep.subr.mxu0 0.0
        %1593 = vmatpush1.msra.mxu0 0.0
        %1594 = vmatprep.subr.mxu0 0.0
        %1595 = vmatpush1.msra.mxu0 0.0
        %1596 = vmatprep.mubr.f32.mxu0 0.0
        %1597 = vmatmul.mubr.f32.gmra.mrb[0].mxu0 %v1530
        %v1598 = vpop.f32.mrb[0].mxu0
        %v1599 = vadd.f32 0.0, %v1598
        %v1600 = vpop.f32.mrb[0].mxu0
        %v1601 = vadd.f32 0.0, %v1600
        %1602 = vdwg.mxu0
        %v1603 = vadd.f32 %v1513, %v1599
        %v1604 = vadd.f32 %v1514, %v1601
        %s1605 = scalar_lea.vmem %s2, 32
        %v1606 = vld [vmem:[%s1605] sm:$0xff]
        %v1608 = vsel %vm1276, %v1606, 0
        %1610 = vmatprep.subr.mxu0 %v1247
        %1611 = vmatpush1.msra.mxu0 %v1246
        %1612 = vmatprep.subr.mxu0 0.0
        %1613 = vmatpush1.msra.mxu0 0.0
        %1614 = vmatprep.subr.mxu0 0.0
        %1615 = vmatpush1.msra.mxu0 0.0
        %1616 = vmatprep.subr.mxu0 0.0
        %1617 = vmatpush1.msra.mxu0 0.0
        %1618 = vmatprep.subr.mxu0 0.0
        %1619 = vmatpush1.msra.mxu0 0.0
        %1620 = vmatprep.subr.mxu0 0.0
        %1621 = vmatpush1.msra.mxu0 0.0
        %1622 = vmatprep.subr.mxu0 0.0
        %1623 = vmatpush1.msra.mxu0 0.0
        %1624 = vmatprep.subr.mxu0 0.0
        %1625 = vmatpush1.msra.mxu0 0.0
        %1626 = vmatprep.subr.mxu0 0.0
        %1627 = vmatpush1.msra.mxu0 0.0
        %1628 = vmatprep.subr.mxu0 0.0
        %1629 = vmatpush1.msra.mxu0 0.0
        %1630 = vmatprep.subr.mxu0 0.0
        %1631 = vmatpush1.msra.mxu0 0.0
        %1632 = vmatprep.subr.mxu0 0.0
        %1633 = vmatpush1.msra.mxu0 0.0
        %1634 = vmatprep.subr.mxu0 0.0
        %1635 = vmatpush1.msra.mxu0 0.0
        %1636 = vmatprep.subr.mxu0 0.0
        %1637 = vmatpush1.msra.mxu0 0.0
        %1638 = vmatprep.subr.mxu0 0.0
        %1639 = vmatpush1.msra.mxu0 0.0
        %1640 = vmatprep.subr.mxu0 0.0
        %1641 = vmatpush1.msra.mxu0 0.0
        %1642 = vmatprep.subr.mxu0 0.0
        %1643 = vmatpush1.msra.mxu0 0.0
        %1644 = vmatprep.subr.mxu0 0.0
        %1645 = vmatpush1.msra.mxu0 0.0
        %1646 = vmatprep.subr.mxu0 0.0
        %1647 = vmatpush1.msra.mxu0 0.0
        %1648 = vmatprep.subr.mxu0 0.0
        %1649 = vmatpush1.msra.mxu0 0.0
        %1650 = vmatprep.subr.mxu0 0.0
        %1651 = vmatpush1.msra.mxu0 0.0
        %1652 = vmatprep.subr.mxu0 0.0
        %1653 = vmatpush1.msra.mxu0 0.0
        %1654 = vmatprep.subr.mxu0 0.0
        %1655 = vmatpush1.msra.mxu0 0.0
        %1656 = vmatprep.subr.mxu0 0.0
        %1657 = vmatpush1.msra.mxu0 0.0
        %1658 = vmatprep.subr.mxu0 0.0
        %1659 = vmatpush1.msra.mxu0 0.0
        %1660 = vmatprep.subr.mxu0 0.0
        %1661 = vmatpush1.msra.mxu0 0.0
        %1662 = vmatprep.subr.mxu0 0.0
        %1663 = vmatpush1.msra.mxu0 0.0
        %1664 = vmatprep.subr.mxu0 0.0
        %1665 = vmatpush1.msra.mxu0 0.0
        %1666 = vmatprep.subr.mxu0 0.0
        %1667 = vmatpush1.msra.mxu0 0.0
        %1668 = vmatprep.subr.mxu0 0.0
        %1669 = vmatpush1.msra.mxu0 0.0
        %1670 = vmatprep.subr.mxu0 0.0
        %1671 = vmatpush1.msra.mxu0 0.0
        %1672 = vmatprep.subr.mxu0 0.0
        %1673 = vmatpush1.msra.mxu0 0.0
        %1674 = vmatprep.mubr.f32.mxu0 0.0
        %1675 = vmatmul.mubr.f32.gmra.mrb[0].mxu0 %v1608
        %v1676 = vpop.f32.mrb[0].mxu0
        %v1677 = vadd.f32 0.0, %v1676
        %v1678 = vpop.f32.mrb[0].mxu0
        %v1679 = vadd.f32 0.0, %v1678
        %1680 = vdwg.mxu0
        %v1681 = vadd.f32 %v1603, %v1677
        %v1682 = vadd.f32 %v1604, %v1679
        %v1683 = vld [vmem:[#allocation3 + $0x8] sm:$0xff]
        %v1684 = vld [vmem:[#allocation3 + $0x10] sm:$0xff]
        %v1685 = vld [vmem:[#allocation3 + $0x18] sm:$0xff]
        %1689 = vrot.lane.b32.xlu0 %v1683, 127
        %v1690 = vpop.permute.xlu0 %1689
        %1691 = vrot.lane.b32.xlu0 %v1684, 127
        %v1692 = vpop.permute.xlu0 %1691
        %1693 = vrot.lane.b32.xlu0 %v1685, 127
        %v1694 = vpop.permute.xlu0 %1693
        %v1695 = vsel %vm838, %v1690, %v1692
        %v1696 = vsel %vm838, %v1692, %v1694
        %v1699 = vsel %vm538, %v1695, 0.0
        %v1700 = vsel %vm539, %v1696, 0.0
        %s1701 = scalar_lea.vmem %s2, 40
        %v1702 = vld [vmem:[%s1701] sm:$0xff]
        %v1704 = vsel %vm1276, %v1702, 0
        %1706 = vmatprep.subr.mxu0 %v1700
        %1707 = vmatpush1.msra.mxu0 %v1699
        %1708 = vmatprep.subr.mxu0 0.0
        %1709 = vmatpush1.msra.mxu0 0.0
        %1710 = vmatprep.subr.mxu0 0.0
        %1711 = vmatpush1.msra.mxu0 0.0
        %1712 = vmatprep.subr.mxu0 0.0
        %1713 = vmatpush1.msra.mxu0 0.0
        %1714 = vmatprep.subr.mxu0 0.0
        %1715 = vmatpush1.msra.mxu0 0.0
        %1716 = vmatprep.subr.mxu0 0.0
        %1717 = vmatpush1.msra.mxu0 0.0
        %1718 = vmatprep.subr.mxu0 0.0
        %1719 = vmatpush1.msra.mxu0 0.0
        %1720 = vmatprep.subr.mxu0 0.0
        %1721 = vmatpush1.msra.mxu0 0.0
        %1722 = vmatprep.subr.mxu0 0.0
        %1723 = vmatpush1.msra.mxu0 0.0
        %1724 = vmatprep.subr.mxu0 0.0
        %1725 = vmatpush1.msra.mxu0 0.0
        %1726 = vmatprep.subr.mxu0 0.0
        %1727 = vmatpush1.msra.mxu0 0.0
        %1728 = vmatprep.subr.mxu0 0.0
        %1729 = vmatpush1.msra.mxu0 0.0
        %1730 = vmatprep.subr.mxu0 0.0
        %1731 = vmatpush1.msra.mxu0 0.0
        %1732 = vmatprep.subr.mxu0 0.0
        %1733 = vmatpush1.msra.mxu0 0.0
        %1734 = vmatprep.subr.mxu0 0.0
        %1735 = vmatpush1.msra.mxu0 0.0
        %1736 = vmatprep.subr.mxu0 0.0
        %1737 = vmatpush1.msra.mxu0 0.0
        %1738 = vmatprep.subr.mxu0 0.0
        %1739 = vmatpush1.msra.mxu0 0.0
        %1740 = vmatprep.subr.mxu0 0.0
        %1741 = vmatpush1.msra.mxu0 0.0
        %1742 = vmatprep.subr.mxu0 0.0
        %1743 = vmatpush1.msra.mxu0 0.0
        %1744 = vmatprep.subr.mxu0 0.0
        %1745 = vmatpush1.msra.mxu0 0.0
        %1746 = vmatprep.subr.mxu0 0.0
        %1747 = vmatpush1.msra.mxu0 0.0
        %1748 = vmatprep.subr.mxu0 0.0
        %1749 = vmatpush1.msra.mxu0 0.0
        %1750 = vmatprep.subr.mxu0 0.0
        %1751 = vmatpush1.msra.mxu0 0.0
        %1752 = vmatprep.subr.mxu0 0.0
        %1753 = vmatpush1.msra.mxu0 0.0
        %1754 = vmatprep.subr.mxu0 0.0
        %1755 = vmatpush1.msra.mxu0 0.0
        %1756 = vmatprep.subr.mxu0 0.0
        %1757 = vmatpush1.msra.mxu0 0.0
        %1758 = vmatprep.subr.mxu0 0.0
        %1759 = vmatpush1.msra.mxu0 0.0
        %1760 = vmatprep.subr.mxu0 0.0
        %1761 = vmatpush1.msra.mxu0 0.0
        %1762 = vmatprep.subr.mxu0 0.0
        %1763 = vmatpush1.msra.mxu0 0.0
        %1764 = vmatprep.subr.mxu0 0.0
        %1765 = vmatpush1.msra.mxu0 0.0
        %1766 = vmatprep.subr.mxu0 0.0
        %1767 = vmatpush1.msra.mxu0 0.0
        %1768 = vmatprep.subr.mxu0 0.0
        %1769 = vmatpush1.msra.mxu0 0.0
        %1770 = vmatprep.mubr.f32.mxu0 0.0
        %1771 = vmatmul.mubr.f32.gmra.mrb[0].mxu0 %v1704
        %v1772 = vpop.f32.mrb[0].mxu0
        %v1773 = vadd.f32 0.0, %v1772
        %v1774 = vpop.f32.mrb[0].mxu0
        %v1775 = vadd.f32 0.0, %v1774
        %1776 = vdwg.mxu0
        %v1777 = vadd.f32 %v1681, %v1773
        %v1778 = vadd.f32 %v1682, %v1775
        %1779 = vrot.lane.b32.xlu0 %v1683, 113
        %v1780 = vpop.permute.xlu0 %1779
        %1781 = vrot.lane.b32.xlu0 %v1684, 113
        %v1782 = vpop.permute.xlu0 %1781
        %1783 = vrot.lane.b32.xlu0 %v1685, 113
        %v1784 = vpop.permute.xlu0 %1783
        %v1785 = vsel %vm940, %v1780, %v1782
        %v1786 = vsel %vm940, %v1782, %v1784
        %v1789 = vsel %vm344, %v1785, 0.0
        %v1790 = vsel %vm345, %v1786, 0.0
        %s1791 = scalar_lea.vmem %s2, 48
        %v1792 = vld [vmem:[%s1791] sm:$0xff]
        %v1794 = vsel %vm1276, %v1792, 0
        %1796 = vmatprep.subr.mxu0 %v1790
        %1797 = vmatpush1.msra.mxu0 %v1789
        %1798 = vmatprep.subr.mxu0 0.0
        %1799 = vmatpush1.msra.mxu0 0.0
        %1800 = vmatprep.subr.mxu0 0.0
        %1801 = vmatpush1.msra.mxu0 0.0
        %1802 = vmatprep.subr.mxu0 0.0
        %1803 = vmatpush1.msra.mxu0 0.0
        %1804 = vmatprep.subr.mxu0 0.0
        %1805 = vmatpush1.msra.mxu0 0.0
        %1806 = vmatprep.subr.mxu0 0.0
        %1807 = vmatpush1.msra.mxu0 0.0
        %1808 = vmatprep.subr.mxu0 0.0
        %1809 = vmatpush1.msra.mxu0 0.0
        %1810 = vmatprep.subr.mxu0 0.0
        %1811 = vmatpush1.msra.mxu0 0.0
        %1812 = vmatprep.subr.mxu0 0.0
        %1813 = vmatpush1.msra.mxu0 0.0
        %1814 = vmatprep.subr.mxu0 0.0
        %1815 = vmatpush1.msra.mxu0 0.0
        %1816 = vmatprep.subr.mxu0 0.0
        %1817 = vmatpush1.msra.mxu0 0.0
        %1818 = vmatprep.subr.mxu0 0.0
        %1819 = vmatpush1.msra.mxu0 0.0
        %1820 = vmatprep.subr.mxu0 0.0
        %1821 = vmatpush1.msra.mxu0 0.0
        %1822 = vmatprep.subr.mxu0 0.0
        %1823 = vmatpush1.msra.mxu0 0.0
        %1824 = vmatprep.subr.mxu0 0.0
        %1825 = vmatpush1.msra.mxu0 0.0
        %1826 = vmatprep.subr.mxu0 0.0
        %1827 = vmatpush1.msra.mxu0 0.0
        %1828 = vmatprep.subr.mxu0 0.0
        %1829 = vmatpush1.msra.mxu0 0.0
        %1830 = vmatprep.subr.mxu0 0.0
        %1831 = vmatpush1.msra.mxu0 0.0
        %1832 = vmatprep.subr.mxu0 0.0
        %1833 = vmatpush1.msra.mxu0 0.0
        %1834 = vmatprep.subr.mxu0 0.0
        %1835 = vmatpush1.msra.mxu0 0.0
        %1836 = vmatprep.subr.mxu0 0.0
        %1837 = vmatpush1.msra.mxu0 0.0
        %1838 = vmatprep.subr.mxu0 0.0
        %1839 = vmatpush1.msra.mxu0 0.0
        %1840 = vmatprep.subr.mxu0 0.0
        %1841 = vmatpush1.msra.mxu0 0.0
        %1842 = vmatprep.subr.mxu0 0.0
        %1843 = vmatpush1.msra.mxu0 0.0
        %1844 = vmatprep.subr.mxu0 0.0
        %1845 = vmatpush1.msra.mxu0 0.0
        %1846 = vmatprep.subr.mxu0 0.0
        %1847 = vmatpush1.msra.mxu0 0.0
        %1848 = vmatprep.subr.mxu0 0.0
        %1849 = vmatpush1.msra.mxu0 0.0
        %1850 = vmatprep.subr.mxu0 0.0
        %1851 = vmatpush1.msra.mxu0 0.0
        %1852 = vmatprep.subr.mxu0 0.0
        %1853 = vmatpush1.msra.mxu0 0.0
        %1854 = vmatprep.subr.mxu0 0.0
        %1855 = vmatpush1.msra.mxu0 0.0
        %1856 = vmatprep.subr.mxu0 0.0
        %1857 = vmatpush1.msra.mxu0 0.0
        %1858 = vmatprep.subr.mxu0 0.0
        %1859 = vmatpush1.msra.mxu0 0.0
        %1860 = vmatprep.mubr.f32.mxu0 0.0
        %1861 = vmatmul.mubr.f32.gmra.mrb[0].mxu0 %v1794
        %v1862 = vpop.f32.mrb[0].mxu0
        %v1863 = vadd.f32 0.0, %v1862
        %v1864 = vpop.f32.mrb[0].mxu0
        %v1865 = vadd.f32 0.0, %v1864
        %1866 = vdwg.mxu0
        %v1867 = vadd.f32 %v1777, %v1863
        %v1868 = vadd.f32 %v1778, %v1865
        %s1869 = scalar_lea.vmem %s2, 56
        %v1870 = vld [vmem:[%s1869] sm:$0xff]
        %1871 = vrot.lane.b32.xlu0 %v1683, 112
        %v1872 = vpop.permute.xlu0 %1871
        %1873 = vrot.lane.b32.xlu0 %v1684, 112
        %v1874 = vpop.permute.xlu0 %1873
        %1875 = vrot.lane.b32.xlu0 %v1685, 112
        %v1876 = vpop.permute.xlu0 %1875
        %v1877 = vsel %vm1044, %v1872, %v1874
        %v1878 = vsel %vm1044, %v1874, %v1876
        %v1882 = vsel %vm1276, %v1870, 0
        %1884 = vmatprep.subr.mxu0 %v1878
        %1885 = vmatpush1.msra.mxu0 %v1877
        %1886 = vmatprep.subr.mxu0 0.0
        %1887 = vmatpush1.msra.mxu0 0.0
        %1888 = vmatprep.subr.mxu0 0.0
        %1889 = vmatpush1.msra.mxu0 0.0
        %1890 = vmatprep.subr.mxu0 0.0
        %1891 = vmatpush1.msra.mxu0 0.0
        %1892 = vmatprep.subr.mxu0 0.0
        %1893 = vmatpush1.msra.mxu0 0.0
        %1894 = vmatprep.subr.mxu0 0.0
        %1895 = vmatpush1.msra.mxu0 0.0
        %1896 = vmatprep.subr.mxu0 0.0
        %1897 = vmatpush1.msra.mxu0 0.0
        %1898 = vmatprep.subr.mxu0 0.0
        %1899 = vmatpush1.msra.mxu0 0.0
        %1900 = vmatprep.subr.mxu0 0.0
        %1901 = vmatpush1.msra.mxu0 0.0
        %1902 = vmatprep.subr.mxu0 0.0
        %1903 = vmatpush1.msra.mxu0 0.0
        %1904 = vmatprep.subr.mxu0 0.0
        %1905 = vmatpush1.msra.mxu0 0.0
        %1906 = vmatprep.subr.mxu0 0.0
        %1907 = vmatpush1.msra.mxu0 0.0
        %1908 = vmatprep.subr.mxu0 0.0
        %1909 = vmatpush1.msra.mxu0 0.0
        %1910 = vmatprep.subr.mxu0 0.0
        %1911 = vmatpush1.msra.mxu0 0.0
        %1912 = vmatprep.subr.mxu0 0.0
        %1913 = vmatpush1.msra.mxu0 0.0
        %1914 = vmatprep.subr.mxu0 0.0
        %1915 = vmatpush1.msra.mxu0 0.0
        %1916 = vmatprep.subr.mxu0 0.0
        %1917 = vmatpush1.msra.mxu0 0.0
        %1918 = vmatprep.subr.mxu0 0.0
        %1919 = vmatpush1.msra.mxu0 0.0
        %1920 = vmatprep.subr.mxu0 0.0
        %1921 = vmatpush1.msra.mxu0 0.0
        %1922 = vmatprep.subr.mxu0 0.0
        %1923 = vmatpush1.msra.mxu0 0.0
        %1924 = vmatprep.subr.mxu0 0.0
        %1925 = vmatpush1.msra.mxu0 0.0
        %1926 = vmatprep.subr.mxu0 0.0
        %1927 = vmatpush1.msra.mxu0 0.0
        %1928 = vmatprep.subr.mxu0 0.0
        %1929 = vmatpush1.msra.mxu0 0.0
        %1930 = vmatprep.subr.mxu0 0.0
        %1931 = vmatpush1.msra.mxu0 0.0
        %1932 = vmatprep.subr.mxu0 0.0
        %1933 = vmatpush1.msra.mxu0 0.0
        %1934 = vmatprep.subr.mxu0 0.0
        %1935 = vmatpush1.msra.mxu0 0.0
        %1936 = vmatprep.subr.mxu0 0.0
        %1937 = vmatpush1.msra.mxu0 0.0
        %1938 = vmatprep.subr.mxu0 0.0
        %1939 = vmatpush1.msra.mxu0 0.0
        %1940 = vmatprep.subr.mxu0 0.0
        %1941 = vmatpush1.msra.mxu0 0.0
        %1942 = vmatprep.subr.mxu0 0.0
        %1943 = vmatpush1.msra.mxu0 0.0
        %1944 = vmatprep.subr.mxu0 0.0
        %1945 = vmatpush1.msra.mxu0 0.0
        %1946 = vmatprep.subr.mxu0 0.0
        %1947 = vmatpush1.msra.mxu0 0.0
        %1948 = vmatprep.mubr.f32.mxu0 0.0
        %1949 = vmatmul.mubr.f32.gmra.mrb[0].mxu0 %v1882
        %v1950 = vpop.f32.mrb[0].mxu0
        %v1951 = vadd.f32 0.0, %v1950
        %v1952 = vpop.f32.mrb[0].mxu0
        %v1953 = vadd.f32 0.0, %v1952
        %1954 = vdwg.mxu0
        %v1955 = vadd.f32 %v1867, %v1951
        %v1956 = vadd.f32 %v1868, %v1953
        %1957 = vrot.lane.b32.xlu0 %v1683, 111
        %v1958 = vpop.permute.xlu0 %1957
        %1959 = vrot.lane.b32.xlu0 %v1684, 111
        %v1960 = vpop.permute.xlu0 %1959
        %1961 = vrot.lane.b32.xlu0 %v1685, 111
        %v1962 = vpop.permute.xlu0 %1961
        %v1963 = vsel %vm1138, %v1958, %v1960
        %v1964 = vsel %vm1138, %v1960, %v1962
        %v1967 = vsel %vm538, %v1963, 0.0
        %v1968 = vsel %vm539, %v1964, 0.0
        %s1969 = scalar_lea.vmem %s2, 64
        %v1970 = vld [vmem:[%s1969] sm:$0xff]
        %v1972 = vsel %vm1276, %v1970, 0
        %1974 = vmatprep.subr.mxu0 %v1968
        %1975 = vmatpush1.msra.mxu0 %v1967
        %1976 = vmatprep.subr.mxu0 0.0
        %1977 = vmatpush1.msra.mxu0 0.0
        %1978 = vmatprep.subr.mxu0 0.0
        %1979 = vmatpush1.msra.mxu0 0.0
        %1980 = vmatprep.subr.mxu0 0.0
        %1981 = vmatpush1.msra.mxu0 0.0
        %1982 = vmatprep.subr.mxu0 0.0
        %1983 = vmatpush1.msra.mxu0 0.0
        %1984 = vmatprep.subr.mxu0 0.0
        %1985 = vmatpush1.msra.mxu0 0.0
        %1986 = vmatprep.subr.mxu0 0.0
        %1987 = vmatpush1.msra.mxu0 0.0
        %1988 = vmatprep.subr.mxu0 0.0
        %1989 = vmatpush1.msra.mxu0 0.0
        %1990 = vmatprep.subr.mxu0 0.0
        %1991 = vmatpush1.msra.mxu0 0.0
        %1992 = vmatprep.subr.mxu0 0.0
        %1993 = vmatpush1.msra.mxu0 0.0
        %1994 = vmatprep.subr.mxu0 0.0
        %1995 = vmatpush1.msra.mxu0 0.0
        %1996 = vmatprep.subr.mxu0 0.0
        %1997 = vmatpush1.msra.mxu0 0.0
        %1998 = vmatprep.subr.mxu0 0.0
        %1999 = vmatpush1.msra.mxu0 0.0
        %2000 = vmatprep.subr.mxu0 0.0
        %2001 = vmatpush1.msra.mxu0 0.0
        %2002 = vmatprep.subr.mxu0 0.0
        %2003 = vmatpush1.msra.mxu0 0.0
        %2004 = vmatprep.subr.mxu0 0.0
        %2005 = vmatpush1.msra.mxu0 0.0
        %2006 = vmatprep.subr.mxu0 0.0
        %2007 = vmatpush1.msra.mxu0 0.0
        %2008 = vmatprep.subr.mxu0 0.0
        %2009 = vmatpush1.msra.mxu0 0.0
        %2010 = vmatprep.subr.mxu0 0.0
        %2011 = vmatpush1.msra.mxu0 0.0
        %2012 = vmatprep.subr.mxu0 0.0
        %2013 = vmatpush1.msra.mxu0 0.0
        %2014 = vmatprep.subr.mxu0 0.0
        %2015 = vmatpush1.msra.mxu0 0.0
        %2016 = vmatprep.subr.mxu0 0.0
        %2017 = vmatpush1.msra.mxu0 0.0
        %2018 = vmatprep.subr.mxu0 0.0
        %2019 = vmatpush1.msra.mxu0 0.0
        %2020 = vmatprep.subr.mxu0 0.0
        %2021 = vmatpush1.msra.mxu0 0.0
        %2022 = vmatprep.subr.mxu0 0.0
        %2023 = vmatpush1.msra.mxu0 0.0
        %2024 = vmatprep.subr.mxu0 0.0
        %2025 = vmatpush1.msra.mxu0 0.0
        %2026 = vmatprep.subr.mxu0 0.0
        %2027 = vmatpush1.msra.mxu0 0.0
        %2028 = vmatprep.subr.mxu0 0.0
        %2029 = vmatpush1.msra.mxu0 0.0
        %2030 = vmatprep.subr.mxu0 0.0
        %2031 = vmatpush1.msra.mxu0 0.0
        %2032 = vmatprep.subr.mxu0 0.0
        %2033 = vmatpush1.msra.mxu0 0.0
        %2034 = vmatprep.subr.mxu0 0.0
        %2035 = vmatpush1.msra.mxu0 0.0
        %2036 = vmatprep.subr.mxu0 0.0
        %2037 = vmatpush1.msra.mxu0 0.0
        %2038 = vmatprep.mubr.f32.mxu0 0.0
        %2039 = vmatmul.mubr.f32.gmra.mrb[0].mxu0 %v1972
        %v2040 = vpop.f32.mrb[0].mxu0
        %v2041 = vadd.f32 0.0, %v2040
        %v2042 = vpop.f32.mrb[0].mxu0
        %v2043 = vadd.f32 0.0, %v2042
        %2044 = vdwg.mxu0
        %v2045 = vadd.f32 %v1955, %v2041
        %v2046 = vadd.f32 %v1956, %v2043
        %v2047 = vld [vmem:[%s6] sm:$0xff]
        %2049 = vset.pattern.permute.xlu0 0
        %2050 = vperm.xlu0 %2049, %v2047
        %v2051 = vpop.permute.xlu0 %2050
        %v2053 = vadd.f32 %v2045, %v2051
        %v2054 = vadd.f32 %v2046, %v2051
        %v2055 = vmul.f32 %v2053, 0.01
        %v2056 = vmul.f32 %v2054, 0.01
        %v2057 = vmax.f32 %v2053, %v2055
        %v2058 = vmax.f32 %v2054, %v2056
        %2059 = vst [vmem:[%s271] sm:$0xff] %v2057
        %2060 = vst [vmem:[%s271 + $0x8] sm:$0xff] %v2058
        %s2061 = sand.u32 %s181, 1
        %s2062 = scalar_lea.sflag [#allocation5], %s2061
        %s2063 = sand.u32 %s181, 1
        %s2064 = smul.addr %s2063, 16
        %s2065 = scalar_lea.vmem [#allocation4], %s2064
        // Predicated region
        $region49: #{tpu_custom_call.1} parent=47 // pred_check
          %p2066 = pneg %p191
        $region50: #{tpu_custom_call.1} parent=47 // pred_check_branch
          %2068 = sbr.rel (%p2066) target = $region52
        $region51: #{tpu_custom_call.1} parent=47 // pred_region
          %s2070 = ssub.s32 256, 256
          %2071 = vsyncadd %s2062, %s2070
          %s2072 = smul.addr %s21, 2
          %s2073 = smul.addr %s2072, 128
          %s2074 = scalar_lea.hbm %s7, %s2073
          %s2076 = sshll.u32 %s2065, 4
          %s2077 = int_to_ptr.vmem [resolvable:$true] %s2076
          %2079 = dma.vmem_to_hbm [thread:$0]  %s2077, 256, %s2074, %s2062
        $region52: #{tpu_custom_call.1} parent=47 // pred_fallthru
          _
      $region48: #{tpu_custom_call.1} parent=5 // pred_fallthru
        _
      %p2080 = scmp.le.s32.totalorder 2, %s16
      // Predicated region
      $region53: #{tpu_custom_call.1} parent=5 // pred_check
        %p2081 = pneg %p2080
      $region54: #{tpu_custom_call.1} parent=5 // pred_check_branch
        %2083 = sbr.rel (%p2081) target = $region56
      $region55: #{tpu_custom_call.1} parent=5 // pred_region
        %s2084 = ssub.s32 %s16, 2
        // Predicated region
        $region57: #{tpu_custom_call.1} parent=55 // pred_check
          %p2085 = pneg %p197
        $region58: #{tpu_custom_call.1} parent=55 // pred_check_branch
          %2087 = sbr.rel (%p2085) target = $region60
        $region59: #{tpu_custom_call.1} parent=55 // pred_region
          %s2088 = sand.u32 %s182, 1
          %s2089 = scalar_lea.sflag [#allocation5], %s2088
          %s2090 = sand.u32 %s182, 1
          %s2091 = smul.addr %s2090, 16
          %s2092 = scalar_lea.vmem [#allocation4], %s2091
          %2093 = dma.done %s2089, 256
        $region60: #{tpu_custom_call.1} parent=55 // pred_fallthru
          _
      $region56: #{tpu_custom_call.1} parent=5 // pred_fallthru
        _
    $region6: #{tpu_custom_call.1} parent=1 // loop_footer
      %s20 = sadd.s32 1, %s16
    $region7: #{tpu_custom_call.1} parent=1 // loop_footer_branch
      %15 = sbr.rel target = $region3
    $region8: #{tpu_custom_call.1} parent=1 // loop_exit
      _
    %2094 = vsyncpa [#allocation5], 1
    %s2095 = scalar_lea.sflag [#allocation5], 1
    %2096 = vsyncpa %s2095, 1

</llo_original>
